<compile_context>
chip_gen: v7x
topology: tpu7x:2x2x1
jax: 0.10.0
libtpu: 0.0.40
codegen_flags: <defaults>
</compile_context>

<pallas_src>
import numpy as np
import jax
import jax.numpy as jnp
from jax.experimental import pallas as pl
from jax.experimental.pallas import tpu as pltpu


def _round_up(x, m):
    return ((x + m - 1) // m) * m


# -----------------------------------------------------------------------------
# Kernel: one real (D0, D1) slice -> cropped real(IFFT2(H_sym * FFT2(x))).
# Half-spectrum DFT + Karatsuba complex matmuls + crop folded into the inverse
# factors.  10 bf16 MXU matmuls per slice, f32 accumulation, f32 elementwise.
# -----------------------------------------------------------------------------
def _hfor_half_kernel(x_ref, hr_ref, hi_ref,
                      f1r_ref, f1i_ref,
                      f0r_ref, f0i_ref, f0s_ref,
                      if0r_ref, if0i_ref, if0s_ref,
                      wr_ref, wi_ref,
                      o_ref):
    bf16 = jnp.bfloat16

    def mm(a, b):
        return jnp.dot(a, b, preferred_element_type=jnp.float32)

    x = x_ref[0]                              # (D0, D1) bf16 (cast on host)

    # Stage 1 -- row DFT onto the half spectrum (real input -> 2 matmuls).
    a_r = mm(x, f1r_ref[...])                 # (D0, K1p) f32
    a_i = mm(x, f1i_ref[...])

    # Cast each operand to bf16 exactly once.
    a_s = (a_r + a_i).astype(bf16)
    a_rb = a_r.astype(bf16)
    a_ib = a_i.astype(bf16)

    # Stage 2 -- column DFT: 3-multiply (Karatsuba) complex matmul.
    t1 = mm(f0r_ref[...], a_rb)
    t2 = mm(f0i_ref[...], a_ib)
    t3 = mm(f0s_ref[...], a_s)
    x_r = t1 - t2
    x_i = t3 - t1 - t2

    # Stage 3 -- elementwise complex multiply with symmetrized H (f32, VPU).
    hr = hr_ref[...]
    hi = hi_ref[...]
    y_r = hr * x_r - hi * x_i
    y_i = hr * x_i + hi * x_r

    y_s = (y_r + y_i).astype(bf16)
    y_rb = y_r.astype(bf16)
    y_ib = y_i.astype(bf16)

    # Stage 4 -- inverse column DFT with the row crop folded in (Karatsuba).
    u1 = mm(if0r_ref[...], y_rb)
    u2 = mm(if0i_ref[...], y_ib)
    u3 = mm(if0s_ref[...], y_s)
    p_rb = (u1 - u2).astype(bf16)
    p_ib = (u3 - u1 - u2).astype(bf16)

    # Stage 5 -- real inverse row DFT from the half spectrum, column crop and
    # Hermitian recombination weights folded into Wr / Wi.
    o_ref[0] = mm(p_rb, wr_ref[...]) + mm(p_ib, wi_ref[...])


class ForwardModelCombined:
    """JAX/Pallas port of Forward_Model_combined."""

    def __init__(self, h_in, imaging_type='2D', shutter=None):
        self.imaging_type = imaging_type
        self.DIMS0 = int(h_in.shape[0])
        self.DIMS1 = int(h_in.shape[1])
        self.PAD_SIZE0 = self.DIMS0 // 2
        self.PAD_SIZE1 = self.DIMS1 // 2

        # crop_forward window (folded into the inverse factors below).
        self.C01 = self.PAD_SIZE0 // 2
        self.C02 = self.C01 + self.DIMS0 // 2
        self.C11 = self.PAD_SIZE1 // 2
        self.C12 = self.C11 + self.DIMS1 // 2
        self.D0C = self.C02 - self.C01
        self.D1C = self.C12 - self.C11

        D0, D1 = self.DIMS0, self.DIMS1
        # Half-spectrum width (rfft): D1//2 + 1 columns, padded for layout.
        self.K1 = D1 // 2 + 1
        self.K1P = (_round_up(self.K1, 128) if self.K1 >= 128
                    else _round_up(self.K1, 8))
        K1, K1P = self.K1, self.K1P

        f64 = np.float64
        bf = jnp.bfloat16

        # --- H symmetrization: for real x, real(IFFT2(H*X)) == IFFT2(H_sym*X). ---
        h = np.asarray(h_in, dtype=np.complex128)
        neg0 = (-np.arange(D0)) % D0
        neg1 = (-np.arange(D1)) % D1
        h_sym = 0.5 * (h + np.conj(h[np.ix_(neg0, neg1)]))
        hr = np.zeros((D0, K1P), np.float32)
        hi = np.zeros((D0, K1P), np.float32)
        hr[:, :K1] = np.real(h_sym[:, :K1]).astype(np.float32)
        hi[:, :K1] = np.imag(h_sym[:, :K1]).astype(np.float32)
        self.Hr = jnp.asarray(hr)                    # f32: elementwise stays f32
        self.Hi = jnp.asarray(hi)

        # --- Forward row DFT (unnormalized, torch.fft), half spectrum. ---
        j1 = np.arange(D1)
        ang1 = 2.0 * np.pi * np.outer(j1, np.arange(K1)).astype(f64) / D1
        f1r = np.zeros((D1, K1P), f64)
        f1i = np.zeros((D1, K1P), f64)
        f1r[:, :K1] = np.cos(ang1)
        f1i[:, :K1] = -np.sin(ang1)
        self.F1r = jnp.asarray(f1r, bf)
        self.F1i = jnp.asarray(f1i, bf)

        # --- Forward column DFT + Karatsuba sum factor. ---
        j0 = np.arange(D0)
        ang0 = 2.0 * np.pi * np.outer(j0, j0).astype(f64) / D0
        f0r = np.cos(ang0)
        f0i = -np.sin(ang0)
        self.F0r = jnp.asarray(f0r, bf)
        self.F0i = jnp.asarray(f0i, bf)
        self.F0s = jnp.asarray(f0r + f0i, bf)

        # --- Inverse column DFT (1/D0, torch.ifft) with the row crop folded in. ---
        n0 = np.arange(self.C01, self.C02)
        iang0 = 2.0 * np.pi * np.outer(n0, j0).astype(f64) / D0
        if0r = np.cos(iang0) / D0
        if0i = np.sin(iang0) / D0
        self.IF0r = jnp.asarray(if0r, bf)            # (D0C, D0)
        self.IF0i = jnp.asarray(if0i, bf)
        self.IF0s = jnp.asarray(if0r + if0i, bf)

        # --- Final real inverse row DFT from the half spectrum (1/D1), with the
        #     column crop and Hermitian recombination weights folded in. ---
        n1 = np.arange(self.C11, self.C12)
        iang1 = 2.0 * np.pi * np.outer(np.arange(K1), n1).astype(f64) / D1
        c = np.full((K1, 1), 2.0)
        c[0, 0] = 1.0
        if D1 % 2 == 0:
            c[D1 // 2, 0] = 1.0                      # Nyquist column counted once
        wr = np.zeros((K1P, self.D1C), f64)
        wi = np.zeros((K1P, self.D1C), f64)
        wr[:K1] = c * np.cos(iang1) / D1
        wi[:K1] = -c * np.sin(iang1) / D1
        self.Wr = jnp.asarray(wr, bf)
        self.Wi = jnp.asarray(wi, bf)

        if shutter is not None:
            self.shutter_var = jnp.asarray(
                np.transpose(np.asarray(shutter), (2, 0, 1)), jnp.float32)[None]
        else:
            self.shutter_var = None

        self._has_buffered = hasattr(pl, "Buffered")
        self._fn_cache = {}

    # ---- VMEM budget: constants + streaming blocks + live temporaries,
    #      capped by the current generation's VMEM capacity. -------------------
    def _vmem_limit_bytes(self):
        d0, d1 = self.DIMS0, self.DIMS1
        d0c, d1c, k1p = self.D0C, self.D1C, self.K1P
        # bf16 DFT factors + f32 H; x2 covers the non-Buffered(1) fallback.
        const_b = 2 * (2 * d1 * k1p + 3 * d0 * d0 + 3 * d0c * d0 + 2 * k1p * d1c)
        const_b += 4 * 2 * d0 * k1p
        const_b *= 2
        # Double-buffered streaming blocks: bf16 x slice + f32 output slice.
        io_b = 2 * (2 * d0 * d1 + 4 * d0c * d1c)
        # Live f32 / bf16 temporaries of the 5-stage pipeline (upper bound).
        tmp_b = 4 * 7 * d0 * k1p + 2 * 5 * d0 * k1p + 4 * 4 * d0c * k1p
        est = const_b + io_b + tmp_b + (16 << 20)    # compiler-internal headroom
        cap = 64 << 20                               # safe default (v7x per-TC)
        try:
            info_cap = getattr(pltpu.get_tpu_info(), "vmem_capacity_bytes", None)
            if info_cap and int(info_cap) >= (32 << 20):
                cap = int(info_cap)                  # 128 MiB on v5e/v6e
        except Exception:
            pass
        return int(min(max(est, 32 << 20), int(cap * 0.9)))

    # ---- Pallas hot path: Hfor + crop_forward fused --------------------------
    def _build_pallas_fn(self, n, buffered):
        D0, D1 = self.DIMS0, self.DIMS1
        d0c, d1c, k1p = self.D0C, self.D1C, self.K1P

        def const_spec(shape):
            idx = lambda i: (0,) * len(shape)
            if buffered:
                # Constant index_map -> fetched once; single-buffer to halve the
                # constant VMEM footprint (important on v7x's 64 MiB/TC).
                return pl.BlockSpec(shape, idx, pipeline_mode=pl.Buffered(1))
            return pl.BlockSpec(shape, idx)

        return pl.pallas_call(
            _hfor_half_kernel,
            out_shape=jax.ShapeDtypeStruct((n, d0c, d1c), jnp.float32),
            grid=(n,),
            in_specs=[
                pl.BlockSpec((1, D0, D1), lambda i: (i, 0, 0)),   # x slice (bf16)
                const_spec((D0, k1p)), const_spec((D0, k1p)),     # Hr, Hi (f32)
                const_spec((D1, k1p)), const_spec((D1, k1p)),     # F1r, F1i
                const_spec((D0, D0)), const_spec((D0, D0)), const_spec((D0, D0)),
                const_spec((d0c, D0)), const_spec((d0c, D0)), const_spec((d0c, D0)),
                const_spec((k1p, d1c)), const_spec((k1p, d1c)),   # Wr, Wi
            ],
            out_specs=pl.BlockSpec((1, d0c, d1c), lambda i: (i, 0, 0)),
            compiler_params=pltpu.CompilerParams(
                dimension_semantics=("parallel",),
                vmem_limit_bytes=self._vmem_limit_bytes(),
            ),
        )

    def Hfor_cropped(self, x):
        B, C, D0, D1 = x.shape
        assert (D0, D1) == (self.DIMS0, self.DIMS1), \
            "spatial dims of the (padded) input must match h"
        n = B * C
        # bf16 input: it hits the MXU as bf16 anyway; halves the x DMA + buffers.
        xf = x.reshape(n, D0, D1).astype(jnp.bfloat16)
        args = (xf, self.Hr, self.Hi, self.F1r, self.F1i,
                self.F0r, self.F0i, self.F0s,
                self.IF0r, self.IF0i, self.IF0s, self.Wr, self.Wi)

        if n in self._fn_cache:
            out = self._fn_cache[n](*args)
        else:
            modes = [True, False] if self._has_buffered else [False]
            out, last_err = None, None
            for buffered in modes:
                try:
                    fn = self._build_pallas_fn(n, buffered)
                    out = fn(*args)
                    self._fn_cache[n] = fn
                    break
                except Exception as e:  # fallback for JAX without Buffered(1) support
                    last_err = e
            if out is None:
                raise last_err
        return out.reshape(B, C, self.D0C, self.D1C)

    # ---- glue (crop is fused into the kernel; kept for API parity) -----------
    def crop_forward(self, x):
        return x[..., self.C01:self.C02, self.C11:self.C12]

    def my_pad(self, x):
        p0 = self.PAD_SIZE0 // 2
        p1 = self.PAD_SIZE1 // 2
        pad_width = [(0, 0)] * (x.ndim - 2) + [(p0, p0), (p1, p1)]
        return jnp.pad(x, pad_width)

    def __call__(self, in_image):
        if self.imaging_type in ('spectral', 'video'):
            # TODO(synk): 5-D (len(shape)==5) spectral/video batching not wired up here.
            return jnp.sum(self.shutter_var * self.Hfor_cropped(self.my_pad(in_image)), axis=1)
        elif self.imaging_type == '2D_erasures':
            # NOTE: as in the PyTorch reference, the shutter must be supplied at
            # the cropped resolution for this branch to broadcast.
            return self.shutter_var * self.Hfor_cropped(in_image)
        elif self.imaging_type == '2D':
            return self.Hfor_cropped(in_image)
        else:
            return jnp.sum(self.Hfor_cropped(in_image), axis=1)


if __name__ == "__main__":
    key = jax.random.PRNGKey(0)
    B, C, D0, D1 = 2, 4, 16, 16
    k1, k2, k3 = jax.random.split(key, 3)

    # Deterministic synthetic "measurement system" h (Fourier-domain, complex).
    h_r = np.asarray(jax.random.normal(k1, (D0, D1), dtype=jnp.float32))
    h_i = np.asarray(jax.random.normal(k2, (D0, D1), dtype=jnp.float32))
    h = h_r + 1j * h_i

    model = ForwardModelCombined(h, imaging_type='2D')

    x = jax.random.normal(k3, (B, C, D0, D1), dtype=jnp.float32)
    out = jax.block_until_ready(model(x))
    assert out.shape == (B, C, D0 // 2, D1 // 2)

    # Reference: full complex-FFT pipeline (torch.fft/ifft semantics) + crop.
    # This also validates the host-side H symmetrization + half-spectrum math.
    X = jnp.fft.fft2(x.astype(jnp.complex64))
    H = jnp.asarray(h, jnp.complex64)[None, None]
    ref_full = jnp.real(jnp.fft.ifft2(H * X))
    ref = np.asarray(ref_full[..., model.C01:model.C02, model.C11:model.C12])
    outn = np.asarray(out)

    # bf16 MXU inputs with f32 accumulation -> modest elementwise tolerance,
    # plus a tight global relative-L2 check.
    np.testing.assert_allclose(outn, ref, atol=1e-1, rtol=1e-1)
    rel = np.linalg.norm(outn - ref) / np.linalg.norm(ref)
    assert rel < 5e-2, f"relative L2 error too large: {rel}"

    print("KERNEL_OK")
</pallas_src>

<mosaic_0001>
module attributes {stable_mosaic.version = 11 : i64} {
  func.func @_hfor_half_kernel(%arg0: i32, %arg1: memref<1x16x16xbf16, #tpu.memory_space<vmem>>, %arg2: memref<16x16xf32, #tpu.memory_space<vmem>>, %arg3: memref<16x16xf32, #tpu.memory_space<vmem>>, %arg4: memref<16x16xbf16, #tpu.memory_space<vmem>>, %arg5: memref<16x16xbf16, #tpu.memory_space<vmem>>, %arg6: memref<16x16xbf16, #tpu.memory_space<vmem>>, %arg7: memref<16x16xbf16, #tpu.memory_space<vmem>>, %arg8: memref<16x16xbf16, #tpu.memory_space<vmem>>, %arg9: memref<8x16xbf16, #tpu.memory_space<vmem>>, %arg10: memref<8x16xbf16, #tpu.memory_space<vmem>>, %arg11: memref<8x16xbf16, #tpu.memory_space<vmem>>, %arg12: memref<16x8xbf16, #tpu.memory_space<vmem>>, %arg13: memref<16x8xbf16, #tpu.memory_space<vmem>>, %arg14: memref<1x8x8xf32, #tpu.memory_space<vmem>>) attributes {dimension_semantics = [#tpu.dimension_semantics<parallel>], iteration_bounds = array<i64: 8>, scalar_prefetch = 0 : i64, scratch_operands = 0 : i64, tpu.core_type = #tpu.core_type<tc>, window_params = [{transform_indices = @transform_0, window_bounds = array<i64: 1, 16, 16>}, {pipeline_mode = #tpu.pipeline_mode<synchronous>, transform_indices = @transform_1, window_bounds = array<i64: 16, 16>}, {pipeline_mode = #tpu.pipeline_mode<synchronous>, transform_indices = @transform_2, window_bounds = array<i64: 16, 16>}, {pipeline_mode = #tpu.pipeline_mode<synchronous>, transform_indices = @transform_3, window_bounds = array<i64: 16, 16>}, {pipeline_mode = #tpu.pipeline_mode<synchronous>, transform_indices = @transform_4, window_bounds = array<i64: 16, 16>}, {pipeline_mode = #tpu.pipeline_mode<synchronous>, transform_indices = @transform_5, window_bounds = array<i64: 16, 16>}, {pipeline_mode = #tpu.pipeline_mode<synchronous>, transform_indices = @transform_6, window_bounds = array<i64: 16, 16>}, {pipeline_mode = #tpu.pipeline_mode<synchronous>, transform_indices = @transform_7, window_bounds = array<i64: 16, 16>}, {pipeline_mode = #tpu.pipeline_mode<synchronous>, transform_indices = @transform_8, window_bounds = array<i64: 8, 16>}, {pipeline_mode = #tpu.pipeline_mode<synchronous>, transform_indices = @transform_9, window_bounds = array<i64: 8, 16>}, {pipeline_mode = #tpu.pipeline_mode<synchronous>, transform_indices = @transform_10, window_bounds = array<i64: 8, 16>}, {pipeline_mode = #tpu.pipeline_mode<synchronous>, transform_indices = @transform_11, window_bounds = array<i64: 16, 8>}, {pipeline_mode = #tpu.pipeline_mode<synchronous>, transform_indices = @transform_12, window_bounds = array<i64: 16, 8>}, {transform_indices = @transform_13, window_bounds = array<i64: 1, 8, 8>}]} {
    %c0 = arith.constant 0 : index
    %c0_0 = arith.constant 0 : index
    %c0_1 = arith.constant 0 : index
    %0 = vector.load %arg1[%c0, %c0_0, %c0_1] : memref<1x16x16xbf16, #tpu.memory_space<vmem>>, vector<1x16x16xbf16>
    %1 = vector.shape_cast %0 : vector<1x16x16xbf16> to vector<16x16xbf16>
    %c0_2 = arith.constant 0 : index
    %c0_3 = arith.constant 0 : index
    %2 = vector.load %arg4[%c0_2, %c0_3] : memref<16x16xbf16, #tpu.memory_space<vmem>>, vector<16x16xbf16>
    %cst = arith.constant dense<0.000000e+00> : vector<16x16xf32>
    %3 = tpu.matmul %1, %2, %cst {dimension_numbers = #tpu.dot_dimension_numbers<[1], [0], [0], [1], [0, 0, 1, 1], [], []>} : vector<16x16xbf16>, vector<16x16xbf16>, vector<16x16xf32> -> vector<16x16xf32>
    %c0_4 = arith.constant 0 : index
    %c0_5 = arith.constant 0 : index
    %4 = vector.load %arg5[%c0_4, %c0_5] : memref<16x16xbf16, #tpu.memory_space<vmem>>, vector<16x16xbf16>
    %cst_6 = arith.constant dense<0.000000e+00> : vector<16x16xf32>
    %5 = tpu.matmul %1, %4, %cst_6 {dimension_numbers = #tpu.dot_dimension_numbers<[1], [0], [0], [1], [0, 0, 1, 1], [], []>} : vector<16x16xbf16>, vector<16x16xbf16>, vector<16x16xf32> -> vector<16x16xf32>
    %6 = arith.addf %3, %5 : vector<16x16xf32>
    %7 = arith.truncf %6 : vector<16x16xf32> to vector<16x16xbf16>
    %8 = arith.truncf %3 : vector<16x16xf32> to vector<16x16xbf16>
    %9 = arith.truncf %5 : vector<16x16xf32> to vector<16x16xbf16>
    %c0_7 = arith.constant 0 : index
    %c0_8 = arith.constant 0 : index
    %10 = vector.load %arg6[%c0_7, %c0_8] : memref<16x16xbf16, #tpu.memory_space<vmem>>, vector<16x16xbf16>
    %cst_9 = arith.constant dense<0.000000e+00> : vector<16x16xf32>
    %11 = tpu.matmul %10, %8, %cst_9 {dimension_numbers = #tpu.dot_dimension_numbers<[1], [0], [0], [1], [0, 0, 1, 1], [], []>} : vector<16x16xbf16>, vector<16x16xbf16>, vector<16x16xf32> -> vector<16x16xf32>
    %c0_10 = arith.constant 0 : index
    %c0_11 = arith.constant 0 : index
    %12 = vector.load %arg7[%c0_10, %c0_11] : memref<16x16xbf16, #tpu.memory_space<vmem>>, vector<16x16xbf16>
    %cst_12 = arith.constant dense<0.000000e+00> : vector<16x16xf32>
    %13 = tpu.matmul %12, %9, %cst_12 {dimension_numbers = #tpu.dot_dimension_numbers<[1], [0], [0], [1], [0, 0, 1, 1], [], []>} : vector<16x16xbf16>, vector<16x16xbf16>, vector<16x16xf32> -> vector<16x16xf32>
    %c0_13 = arith.constant 0 : index
    %c0_14 = arith.constant 0 : index
    %14 = vector.load %arg8[%c0_13, %c0_14] : memref<16x16xbf16, #tpu.memory_space<vmem>>, vector<16x16xbf16>
    %cst_15 = arith.constant dense<0.000000e+00> : vector<16x16xf32>
    %15 = tpu.matmul %14, %7, %cst_15 {dimension_numbers = #tpu.dot_dimension_numbers<[1], [0], [0], [1], [0, 0, 1, 1], [], []>} : vector<16x16xbf16>, vector<16x16xbf16>, vector<16x16xf32> -> vector<16x16xf32>
    %16 = arith.subf %11, %13 : vector<16x16xf32>
    %17 = arith.subf %15, %11 : vector<16x16xf32>
    %18 = arith.subf %17, %13 : vector<16x16xf32>
    %c0_16 = arith.constant 0 : index
    %c0_17 = arith.constant 0 : index
    %19 = vector.load %arg2[%c0_16, %c0_17] : memref<16x16xf32, #tpu.memory_space<vmem>>, vector<16x16xf32>
    %c0_18 = arith.constant 0 : index
    %c0_19 = arith.constant 0 : index
    %20 = vector.load %arg3[%c0_18, %c0_19] : memref<16x16xf32, #tpu.memory_space<vmem>>, vector<16x16xf32>
    %21 = arith.mulf %19, %16 : vector<16x16xf32>
    %22 = arith.mulf %20, %18 : vector<16x16xf32>
    %23 = arith.subf %21, %22 : vector<16x16xf32>
    %24 = arith.mulf %19, %18 : vector<16x16xf32>
    %25 = arith.mulf %20, %16 : vector<16x16xf32>
    %26 = arith.addf %24, %25 : vector<16x16xf32>
    %27 = arith.addf %23, %26 : vector<16x16xf32>
    %28 = arith.truncf %27 : vector<16x16xf32> to vector<16x16xbf16>
    %29 = arith.truncf %23 : vector<16x16xf32> to vector<16x16xbf16>
    %30 = arith.truncf %26 : vector<16x16xf32> to vector<16x16xbf16>
    %c0_20 = arith.constant 0 : index
    %c0_21 = arith.constant 0 : index
    %31 = vector.load %arg9[%c0_20, %c0_21] : memref<8x16xbf16, #tpu.memory_space<vmem>>, vector<8x16xbf16>
    %cst_22 = arith.constant dense<0.000000e+00> : vector<8x16xf32>
    %32 = tpu.matmul %31, %29, %cst_22 {dimension_numbers = #tpu.dot_dimension_numbers<[1], [0], [0], [1], [0, 0, 1, 1], [], []>} : vector<8x16xbf16>, vector<16x16xbf16>, vector<8x16xf32> -> vector<8x16xf32>
    %c0_23 = arith.constant 0 : index
    %c0_24 = arith.constant 0 : index
    %33 = vector.load %arg10[%c0_23, %c0_24] : memref<8x16xbf16, #tpu.memory_space<vmem>>, vector<8x16xbf16>
    %cst_25 = arith.constant dense<0.000000e+00> : vector<8x16xf32>
    %34 = tpu.matmul %33, %30, %cst_25 {dimension_numbers = #tpu.dot_dimension_numbers<[1], [0], [0], [1], [0, 0, 1, 1], [], []>} : vector<8x16xbf16>, vector<16x16xbf16>, vector<8x16xf32> -> vector<8x16xf32>
    %c0_26 = arith.constant 0 : index
    %c0_27 = arith.constant 0 : index
    %35 = vector.load %arg11[%c0_26, %c0_27] : memref<8x16xbf16, #tpu.memory_space<vmem>>, vector<8x16xbf16>
    %cst_28 = arith.constant dense<0.000000e+00> : vector<8x16xf32>
    %36 = tpu.matmul %35, %28, %cst_28 {dimension_numbers = #tpu.dot_dimension_numbers<[1], [0], [0], [1], [0, 0, 1, 1], [], []>} : vector<8x16xbf16>, vector<16x16xbf16>, vector<8x16xf32> -> vector<8x16xf32>
    %37 = arith.subf %32, %34 : vector<8x16xf32>
    %38 = arith.truncf %37 : vector<8x16xf32> to vector<8x16xbf16>
    %39 = arith.subf %36, %32 : vector<8x16xf32>
    %40 = arith.subf %39, %34 : vector<8x16xf32>
    %41 = arith.truncf %40 : vector<8x16xf32> to vector<8x16xbf16>
    %c0_29 = arith.constant 0 : index
    %c0_30 = arith.constant 0 : index
    %42 = vector.load %arg12[%c0_29, %c0_30] : memref<16x8xbf16, #tpu.memory_space<vmem>>, vector<16x8xbf16>
    %cst_31 = arith.constant dense<0.000000e+00> : vector<8x8xf32>
    %43 = tpu.matmul %38, %42, %cst_31 {dimension_numbers = #tpu.dot_dimension_numbers<[1], [0], [0], [1], [0, 0, 1, 1], [], []>} : vector<8x16xbf16>, vector<16x8xbf16>, vector<8x8xf32> -> vector<8x8xf32>
    %c0_32 = arith.constant 0 : index
    %c0_33 = arith.constant 0 : index
    %44 = vector.load %arg13[%c0_32, %c0_33] : memref<16x8xbf16, #tpu.memory_space<vmem>>, vector<16x8xbf16>
    %cst_34 = arith.constant dense<0.000000e+00> : vector<8x8xf32>
    %45 = tpu.matmul %41, %44, %cst_34 {dimension_numbers = #tpu.dot_dimension_numbers<[1], [0], [0], [1], [0, 0, 1, 1], [], []>} : vector<8x16xbf16>, vector<16x8xbf16>, vector<8x8xf32> -> vector<8x8xf32>
    %46 = arith.addf %43, %45 : vector<8x8xf32>
    %c0_35 = arith.constant 0 : index
    %c0_36 = arith.constant 0 : index
    %c0_37 = arith.constant 0 : index
    %47 = vector.load %arg14[%c0_35, %c0_36, %c0_37] : memref<1x8x8xf32, #tpu.memory_space<vmem>>, vector<1x8x8xf32>
    %48 = vector.shape_cast %47 : vector<1x8x8xf32> to vector<8x8xf32>
    %49 = vector.shape_cast %46 : vector<8x8xf32> to vector<1x8x8xf32>
    tpu.vector_store %arg14[%c0_35, %c0_36, %c0_37], %49 {strides = array<i32>} : memref<1x8x8xf32, #tpu.memory_space<vmem>>, vector<1x8x8xf32>,
    return
  }
  func.func @transform_0(%arg0: i32) -> (i32, i32, i32) {
    %c0_i32 = arith.constant 0 : i32
    %c0_i32_0 = arith.constant 0 : i32
    %c0_i32_1 = arith.constant 0 : i32
    return %arg0, %c0_i32, %c0_i32_0 : i32, i32, i32
  }
  func.func @transform_1(%arg0: i32) -> (i32, i32) {
    %c0_i32 = arith.constant 0 : i32
    %c0_i32_0 = arith.constant 0 : i32
    %c0_i32_1 = arith.constant 0 : i32
    return %c0_i32, %c0_i32_0 : i32, i32
  }
  func.func @transform_2(%arg0: i32) -> (i32, i32) {
    %c0_i32 = arith.constant 0 : i32
    %c0_i32_0 = arith.constant 0 : i32
    %c0_i32_1 = arith.constant 0 : i32
    return %c0_i32, %c0_i32_0 : i32, i32
  }
  func.func @transform_3(%arg0: i32) -> (i32, i32) {
    %c0_i32 = arith.constant 0 : i32
    %c0_i32_0 = arith.constant 0 : i32
    %c0_i32_1 = arith.constant 0 : i32
    return %c0_i32, %c0_i32_0 : i32, i32
  }
  func.func @transform_4(%arg0: i32) -> (i32, i32) {
    %c0_i32 = arith.constant 0 : i32
    %c0_i32_0 = arith.constant 0 : i32
    %c0_i32_1 = arith.constant 0 : i32
    return %c0_i32, %c0_i32_0 : i32, i32
  }
  func.func @transform_5(%arg0: i32) -> (i32, i32) {
    %c0_i32 = arith.constant 0 : i32
    %c0_i32_0 = arith.constant 0 : i32
    %c0_i32_1 = arith.constant 0 : i32
    return %c0_i32, %c0_i32_0 : i32, i32
  }
  func.func @transform_6(%arg0: i32) -> (i32, i32) {
    %c0_i32 = arith.constant 0 : i32
    %c0_i32_0 = arith.constant 0 : i32
    %c0_i32_1 = arith.constant 0 : i32
    return %c0_i32, %c0_i32_0 : i32, i32
  }
  func.func @transform_7(%arg0: i32) -> (i32, i32) {
    %c0_i32 = arith.constant 0 : i32
    %c0_i32_0 = arith.constant 0 : i32
    %c0_i32_1 = arith.constant 0 : i32
    return %c0_i32, %c0_i32_0 : i32, i32
  }
  func.func @transform_8(%arg0: i32) -> (i32, i32) {
    %c0_i32 = arith.constant 0 : i32
    %c0_i32_0 = arith.constant 0 : i32
    %c0_i32_1 = arith.constant 0 : i32
    return %c0_i32, %c0_i32_0 : i32, i32
  }
  func.func @transform_9(%arg0: i32) -> (i32, i32) {
    %c0_i32 = arith.constant 0 : i32
    %c0_i32_0 = arith.constant 0 : i32
    %c0_i32_1 = arith.constant 0 : i32
    return %c0_i32, %c0_i32_0 : i32, i32
  }
  func.func @transform_10(%arg0: i32) -> (i32, i32) {
    %c0_i32 = arith.constant 0 : i32
    %c0_i32_0 = arith.constant 0 : i32
    %c0_i32_1 = arith.constant 0 : i32
    return %c0_i32, %c0_i32_0 : i32, i32
  }
  func.func @transform_11(%arg0: i32) -> (i32, i32) {
    %c0_i32 = arith.constant 0 : i32
    %c0_i32_0 = arith.constant 0 : i32
    %c0_i32_1 = arith.constant 0 : i32
    return %c0_i32, %c0_i32_0 : i32, i32
  }
  func.func @transform_12(%arg0: i32) -> (i32, i32) {
    %c0_i32 = arith.constant 0 : i32
    %c0_i32_0 = arith.constant 0 : i32
    %c0_i32_1 = arith.constant 0 : i32
    return %c0_i32, %c0_i32_0 : i32, i32
  }
  func.func @transform_13(%arg0: i32) -> (i32, i32, i32) {
    %c0_i32 = arith.constant 0 : i32
    %c0_i32_0 = arith.constant 0 : i32
    %c0_i32_1 = arith.constant 0 : i32
    return %arg0, %c0_i32, %c0_i32_0 : i32, i32, i32
  }
}

module attributes {stable_mosaic.version = 11 : i64} {
  func.func @_hfor_half_kernel(%arg0: i32, %arg1: memref<1x16x16xbf16, #tpu.memory_space<vmem>>, %arg2: memref<16x16xf32, #tpu.memory_space<vmem>>, %arg3: memref<16x16xf32, #tpu.memory_space<vmem>>, %arg4: memref<16x16xbf16, #tpu.memory_space<vmem>>, %arg5: memref<16x16xbf16, #tpu.memory_space<vmem>>, %arg6: memref<16x16xbf16, #tpu.memory_space<vmem>>, %arg7: memref<16x16xbf16, #tpu.memory_space<vmem>>, %arg8: memref<16x16xbf16, #tpu.memory_space<vmem>>, %arg9: memref<8x16xbf16, #tpu.memory_space<vmem>>, %arg10: memref<8x16xbf16, #tpu.memory_space<vmem>>, %arg11: memref<8x16xbf16, #tpu.memory_space<vmem>>, %arg12: memref<16x8xbf16, #tpu.memory_space<vmem>>, %arg13: memref<16x8xbf16, #tpu.memory_space<vmem>>, %arg14: memref<1x8x8xf32, #tpu.memory_space<vmem>>) attributes {dimension_semantics = [#tpu.dimension_semantics<parallel>], iteration_bounds = array<i64: 8>, scalar_prefetch = 0 : i64, scratch_operands = 0 : i64, tpu.core_type = #tpu.core_type<tc>, window_params = [{transform_indices = @transform_0, window_bounds = array<i64: 1, 16, 16>}, {pipeline_mode = #tpu.pipeline_mode<synchronous>, transform_indices = @transform_1, window_bounds = array<i64: 16, 16>}, {pipeline_mode = #tpu.pipeline_mode<synchronous>, transform_indices = @transform_2, window_bounds = array<i64: 16, 16>}, {pipeline_mode = #tpu.pipeline_mode<synchronous>, transform_indices = @transform_3, window_bounds = array<i64: 16, 16>}, {pipeline_mode = #tpu.pipeline_mode<synchronous>, transform_indices = @transform_4, window_bounds = array<i64: 16, 16>}, {pipeline_mode = #tpu.pipeline_mode<synchronous>, transform_indices = @transform_5, window_bounds = array<i64: 16, 16>}, {pipeline_mode = #tpu.pipeline_mode<synchronous>, transform_indices = @transform_6, window_bounds = array<i64: 16, 16>}, {pipeline_mode = #tpu.pipeline_mode<synchronous>, transform_indices = @transform_7, window_bounds = array<i64: 16, 16>}, {pipeline_mode = #tpu.pipeline_mode<synchronous>, transform_indices = @transform_8, window_bounds = array<i64: 8, 16>}, {pipeline_mode = #tpu.pipeline_mode<synchronous>, transform_indices = @transform_9, window_bounds = array<i64: 8, 16>}, {pipeline_mode = #tpu.pipeline_mode<synchronous>, transform_indices = @transform_10, window_bounds = array<i64: 8, 16>}, {pipeline_mode = #tpu.pipeline_mode<synchronous>, transform_indices = @transform_11, window_bounds = array<i64: 16, 8>}, {pipeline_mode = #tpu.pipeline_mode<synchronous>, transform_indices = @transform_12, window_bounds = array<i64: 16, 8>}, {transform_indices = @transform_13, window_bounds = array<i64: 1, 8, 8>}]} {
    %c0 = arith.constant 0 : index
    %c0_0 = arith.constant 0 : index
    %c0_1 = arith.constant 0 : index
    %0 = vector.load %arg1[%c0, %c0_0, %c0_1] : memref<1x16x16xbf16, #tpu.memory_space<vmem>>, vector<1x16x16xbf16>
    %1 = vector.shape_cast %0 : vector<1x16x16xbf16> to vector<16x16xbf16>
    %c0_2 = arith.constant 0 : index
    %c0_3 = arith.constant 0 : index
    %2 = vector.load %arg4[%c0_2, %c0_3] : memref<16x16xbf16, #tpu.memory_space<vmem>>, vector<16x16xbf16>
    %cst = arith.constant dense<0.000000e+00> : vector<16x16xf32>
    %3 = tpu.matmul %1, %2, %cst {dimension_numbers = #tpu.dot_dimension_numbers<[1], [0], [0], [1], [0, 0, 1, 1], [], []>} : vector<16x16xbf16>, vector<16x16xbf16>, vector<16x16xf32> -> vector<16x16xf32>
    %c0_4 = arith.constant 0 : index
    %c0_5 = arith.constant 0 : index
    %4 = vector.load %arg5[%c0_4, %c0_5] : memref<16x16xbf16, #tpu.memory_space<vmem>>, vector<16x16xbf16>
    %cst_6 = arith.constant dense<0.000000e+00> : vector<16x16xf32>
    %5 = tpu.matmul %1, %4, %cst_6 {dimension_numbers = #tpu.dot_dimension_numbers<[1], [0], [0], [1], [0, 0, 1, 1], [], []>} : vector<16x16xbf16>, vector<16x16xbf16>, vector<16x16xf32> -> vector<16x16xf32>
    %6 = arith.addf %3, %5 : vector<16x16xf32>
    %7 = arith.truncf %6 : vector<16x16xf32> to vector<16x16xbf16>
    %8 = arith.truncf %3 : vector<16x16xf32> to vector<16x16xbf16>
    %9 = arith.truncf %5 : vector<16x16xf32> to vector<16x16xbf16>
    %c0_7 = arith.constant 0 : index
    %c0_8 = arith.constant 0 : index
    %10 = vector.load %arg6[%c0_7, %c0_8] : memref<16x16xbf16, #tpu.memory_space<vmem>>, vector<16x16xbf16>
    %cst_9 = arith.constant dense<0.000000e+00> : vector<16x16xf32>
    %11 = tpu.matmul %10, %8, %cst_9 {dimension_numbers = #tpu.dot_dimension_numbers<[1], [0], [0], [1], [0, 0, 1, 1], [], []>} : vector<16x16xbf16>, vector<16x16xbf16>, vector<16x16xf32> -> vector<16x16xf32>
    %c0_10 = arith.constant 0 : index
    %c0_11 = arith.constant 0 : index
    %12 = vector.load %arg7[%c0_10, %c0_11] : memref<16x16xbf16, #tpu.memory_space<vmem>>, vector<16x16xbf16>
    %cst_12 = arith.constant dense<0.000000e+00> : vector<16x16xf32>
    %13 = tpu.matmul %12, %9, %cst_12 {dimension_numbers = #tpu.dot_dimension_numbers<[1], [0], [0], [1], [0, 0, 1, 1], [], []>} : vector<16x16xbf16>, vector<16x16xbf16>, vector<16x16xf32> -> vector<16x16xf32>
    %c0_13 = arith.constant 0 : index
    %c0_14 = arith.constant 0 : index
    %14 = vector.load %arg8[%c0_13, %c0_14] : memref<16x16xbf16, #tpu.memory_space<vmem>>, vector<16x16xbf16>
    %cst_15 = arith.constant dense<0.000000e+00> : vector<16x16xf32>
    %15 = tpu.matmul %14, %7, %cst_15 {dimension_numbers = #tpu.dot_dimension_numbers<[1], [0], [0], [1], [0, 0, 1, 1], [], []>} : vector<16x16xbf16>, vector<16x16xbf16>, vector<16x16xf32> -> vector<16x16xf32>
    %16 = arith.subf %11, %13 : vector<16x16xf32>
    %17 = arith.subf %15, %11 : vector<16x16xf32>
    %18 = arith.subf %17, %13 : vector<16x16xf32>
    %c0_16 = arith.constant 0 : index
    %c0_17 = arith.constant 0 : index
    %19 = vector.load %arg2[%c0_16, %c0_17] : memref<16x16xf32, #tpu.memory_space<vmem>>, vector<16x16xf32>
    %c0_18 = arith.constant 0 : index
    %c0_19 = arith.constant 0 : index
    %20 = vector.load %arg3[%c0_18, %c0_19] : memref<16x16xf32, #tpu.memory_space<vmem>>, vector<16x16xf32>
    %21 = arith.mulf %19, %16 : vector<16x16xf32>
    %22 = arith.mulf %20, %18 : vector<16x16xf32>
    %23 = arith.subf %21, %22 : vector<16x16xf32>
    %24 = arith.mulf %19, %18 : vector<16x16xf32>
    %25 = arith.mulf %20, %16 : vector<16x16xf32>
    %26 = arith.addf %24, %25 : vector<16x16xf32>
    %27 = arith.addf %23, %26 : vector<16x16xf32>
    %28 = arith.truncf %27 : vector<16x16xf32> to vector<16x16xbf16>
    %29 = arith.truncf %23 : vector<16x16xf32> to vector<16x16xbf16>
    %30 = arith.truncf %26 : vector<16x16xf32> to vector<16x16xbf16>
    %c0_20 = arith.constant 0 : index
    %c0_21 = arith.constant 0 : index
    %31 = vector.load %arg9[%c0_20, %c0_21] : memref<8x16xbf16, #tpu.memory_space<vmem>>, vector<8x16xbf16>
    %cst_22 = arith.constant dense<0.000000e+00> : vector<8x16xf32>
    %32 = tpu.matmul %31, %29, %cst_22 {dimension_numbers = #tpu.dot_dimension_numbers<[1], [0], [0], [1], [0, 0, 1, 1], [], []>} : vector<8x16xbf16>, vector<16x16xbf16>, vector<8x16xf32> -> vector<8x16xf32>
    %c0_23 = arith.constant 0 : index
    %c0_24 = arith.constant 0 : index
    %33 = vector.load %arg10[%c0_23, %c0_24] : memref<8x16xbf16, #tpu.memory_space<vmem>>, vector<8x16xbf16>
    %cst_25 = arith.constant dense<0.000000e+00> : vector<8x16xf32>
    %34 = tpu.matmul %33, %30, %cst_25 {dimension_numbers = #tpu.dot_dimension_numbers<[1], [0], [0], [1], [0, 0, 1, 1], [], []>} : vector<8x16xbf16>, vector<16x16xbf16>, vector<8x16xf32> -> vector<8x16xf32>
    %c0_26 = arith.constant 0 : index
    %c0_27 = arith.constant 0 : index
    %35 = vector.load %arg11[%c0_26, %c0_27] : memref<8x16xbf16, #tpu.memory_space<vmem>>, vector<8x16xbf16>
    %cst_28 = arith.constant dense<0.000000e+00> : vector<8x16xf32>
    %36 = tpu.matmul %35, %28, %cst_28 {dimension_numbers = #tpu.dot_dimension_numbers<[1], [0], [0], [1], [0, 0, 1, 1], [], []>} : vector<8x16xbf16>, vector<16x16xbf16>, vector<8x16xf32> -> vector<8x16xf32>
    %37 = arith.subf %32, %34 : vector<8x16xf32>
    %38 = arith.truncf %37 : vector<8x16xf32> to vector<8x16xbf16>
    %39 = arith.subf %36, %32 : vector<8x16xf32>
    %40 = arith.subf %39, %34 : vector<8x16xf32>
    %41 = arith.truncf %40 : vector<8x16xf32> to vector<8x16xbf16>
    %c0_29 = arith.constant 0 : index
    %c0_30 = arith.constant 0 : index
    %42 = vector.load %arg12[%c0_29, %c0_30] : memref<16x8xbf16, #tpu.memory_space<vmem>>, vector<16x8xbf16>
    %cst_31 = arith.constant dense<0.000000e+00> : vector<8x8xf32>
    %43 = tpu.matmul %38, %42, %cst_31 {dimension_numbers = #tpu.dot_dimension_numbers<[1], [0], [0], [1], [0, 0, 1, 1], [], []>} : vector<8x16xbf16>, vector<16x8xbf16>, vector<8x8xf32> -> vector<8x8xf32>
    %c0_32 = arith.constant 0 : index
    %c0_33 = arith.constant 0 : index
    %44 = vector.load %arg13[%c0_32, %c0_33] : memref<16x8xbf16, #tpu.memory_space<vmem>>, vector<16x8xbf16>
    %cst_34 = arith.constant dense<0.000000e+00> : vector<8x8xf32>
    %45 = tpu.matmul %41, %44, %cst_34 {dimension_numbers = #tpu.dot_dimension_numbers<[1], [0], [0], [1], [0, 0, 1, 1], [], []>} : vector<8x16xbf16>, vector<16x8xbf16>, vector<8x8xf32> -> vector<8x8xf32>
    %46 = arith.addf %43, %45 : vector<8x8xf32>
    %c0_35 = arith.constant 0 : index
    %c0_36 = arith.constant 0 : index
    %c0_37 = arith.constant 0 : index
    %47 = vector.load %arg14[%c0_35, %c0_36, %c0_37] : memref<1x8x8xf32, #tpu.memory_space<vmem>>, vector<1x8x8xf32>
    %48 = vector.shape_cast %47 : vector<1x8x8xf32> to vector<8x8xf32>
    %49 = vector.shape_cast %46 : vector<8x8xf32> to vector<1x8x8xf32>
    tpu.vector_store %arg14[%c0_35, %c0_36, %c0_37], %49 {strides = array<i32>} : memref<1x8x8xf32, #tpu.memory_space<vmem>>, vector<1x8x8xf32>,
    return
  }
  func.func @transform_0(%arg0: i32) -> (i32, i32, i32) {
    %c0_i32 = arith.constant 0 : i32
    %c0_i32_0 = arith.constant 0 : i32
    %c0_i32_1 = arith.constant 0 : i32
    return %arg0, %c0_i32, %c0_i32_0 : i32, i32, i32
  }
  func.func @transform_1(%arg0: i32) -> (i32, i32) {
    %c0_i32 = arith.constant 0 : i32
    %c0_i32_0 = arith.constant 0 : i32
    %c0_i32_1 = arith.constant 0 : i32
    return %c0_i32, %c0_i32_0 : i32, i32
  }
  func.func @transform_2(%arg0: i32) -> (i32, i32) {
    %c0_i32 = arith.constant 0 : i32
    %c0_i32_0 = arith.constant 0 : i32
    %c0_i32_1 = arith.constant 0 : i32
    return %c0_i32, %c0_i32_0 : i32, i32
  }
  func.func @transform_3(%arg0: i32) -> (i32, i32) {
    %c0_i32 = arith.constant 0 : i32
    %c0_i32_0 = arith.constant 0 : i32
    %c0_i32_1 = arith.constant 0 : i32
    return %c0_i32, %c0_i32_0 : i32, i32
  }
  func.func @transform_4(%arg0: i32) -> (i32, i32) {
    %c0_i32 = arith.constant 0 : i32
    %c0_i32_0 = arith.constant 0 : i32
    %c0_i32_1 = arith.constant 0 : i32
    return %c0_i32, %c0_i32_0 : i32, i32
  }
  func.func @transform_5(%arg0: i32) -> (i32, i32) {
    %c0_i32 = arith.constant 0 : i32
    %c0_i32_0 = arith.constant 0 : i32
    %c0_i32_1 = arith.constant 0 : i32
    return %c0_i32, %c0_i32_0 : i32, i32
  }
  func.func @transform_6(%arg0: i32) -> (i32, i32) {
    %c0_i32 = arith.constant 0 : i32
    %c0_i32_0 = arith.constant 0 : i32
    %c0_i32_1 = arith.constant 0 : i32
    return %c0_i32, %c0_i32_0 : i32, i32
  }
  func.func @transform_7(%arg0: i32) -> (i32, i32) {
    %c0_i32 = arith.constant 0 : i32
    %c0_i32_0 = arith.constant 0 : i32
    %c0_i32_1 = arith.constant 0 : i32
    return %c0_i32, %c0_i32_0 : i32, i32
  }
  func.func @transform_8(%arg0: i32) -> (i32, i32) {
    %c0_i32 = arith.constant 0 : i32
    %c0_i32_0 = arith.constant 0 : i32
    %c0_i32_1 = arith.constant 0 : i32
    return %c0_i32, %c0_i32_0 : i32, i32
  }
  func.func @transform_9(%arg0: i32) -> (i32, i32) {
    %c0_i32 = arith.constant 0 : i32
    %c0_i32_0 = arith.constant 0 : i32
    %c0_i32_1 = arith.constant 0 : i32
    return %c0_i32, %c0_i32_0 : i32, i32
  }
  func.func @transform_10(%arg0: i32) -> (i32, i32) {
    %c0_i32 = arith.constant 0 : i32
    %c0_i32_0 = arith.constant 0 : i32
    %c0_i32_1 = arith.constant 0 : i32
    return %c0_i32, %c0_i32_0 : i32, i32
  }
  func.func @transform_11(%arg0: i32) -> (i32, i32) {
    %c0_i32 = arith.constant 0 : i32
    %c0_i32_0 = arith.constant 0 : i32
    %c0_i32_1 = arith.constant 0 : i32
    return %c0_i32, %c0_i32_0 : i32, i32
  }
  func.func @transform_12(%arg0: i32) -> (i32, i32) {
    %c0_i32 = arith.constant 0 : i32
    %c0_i32_0 = arith.constant 0 : i32
    %c0_i32_1 = arith.constant 0 : i32
    return %c0_i32, %c0_i32_0 : i32, i32
  }
  func.func @transform_13(%arg0: i32) -> (i32, i32, i32) {
    %c0_i32 = arith.constant 0 : i32
    %c0_i32_0 = arith.constant 0 : i32
    %c0_i32_1 = arith.constant 0 : i32
    return %arg0, %c0_i32, %c0_i32_0 : i32, i32, i32
  }
}

</mosaic_0001>

<llo_original>
// kernel: tpu_custom_call.1
$region0: #{tpu_custom_call.1}
  #allocation0 [shape = 'u32[]', space=smem, size = 0x4, offset = 0x4, fixed_abs, tag = 'smem constant byte address 0x4 - core index']
  #allocation1 [shape = 'u32[144,128]{1,0:T(1,128)}', space=vmem, size = 0x12000, scoped, tag = 'internal scratch']
  %s0 = inlined_call_operand.hbm [shape: bf16[8,16,16], index: 0, kind: input, shape index: {}]
  %s1 = inlined_call_operand.vmem [shape: f32[16,16], index: 1, kind: input, shape index: {}]
  %s2 = inlined_call_operand.hbm [shape: f32[16,16], index: 2, kind: input, shape index: {}]
  %s3 = inlined_call_operand.vmem [shape: bf16[16,16], index: 3, kind: input, shape index: {}]
  %s4 = inlined_call_operand.vmem [shape: bf16[16,16], index: 4, kind: input, shape index: {}]
  %s5 = inlined_call_operand.vmem [shape: bf16[16,16], index: 5, kind: input, shape index: {}]
  %s6 = inlined_call_operand.hbm [shape: bf16[16,16], index: 6, kind: input, shape index: {}]
  %s7 = inlined_call_operand.vmem [shape: bf16[16,16], index: 7, kind: input, shape index: {}]
  %s8 = inlined_call_operand.vmem [shape: bf16[8,16], index: 8, kind: input, shape index: {}]
  %s9 = inlined_call_operand.vmem [shape: bf16[8,16], index: 9, kind: input, shape index: {}]
  %s10 = inlined_call_operand.vmem [shape: bf16[8,16], index: 10, kind: input, shape index: {}]
  %s11 = inlined_call_operand.vmem [shape: bf16[16,8], index: 11, kind: input, shape index: {}]
  %s12 = inlined_call_operand.vmem [shape: bf16[16,8], index: 12, kind: input, shape index: {}]
  %s13 = inlined_call_operand.hbm [shape: f32[8,8,8], index: 13, kind: output, shape index: {}]
  %s14 = sld [smem:[#allocation0]]
  $region97: #{tpu_custom_call.1} parent=0
    _
  %s16 = ssub.s32 1, %s14
  %s17 = scalar_select 0, %s16, %s14
  $region1: #{tpu_custom_call.1} parent=0
    #allocation2 [shape = 'u8[8192]{0}', space=vmem, size = 0x2000, scoped, tag = 'input window, operand 0']
    #allocation3 [shape = 's32[2]{0}', space=sflag, size = 0x8, scoped, tag = 'scoped memory for tpu_custom_call.1']
    #allocation4 [shape = 's32[2]{0}', space=sflag, size = 0x8, scoped, tag = 'scoped memory for tpu_custom_call.1']
    #allocation5 [shape = 'u8[8192]{0}', space=vmem, size = 0x2000, scoped, tag = 'input window, operand 2, single buffered']
    #allocation6 [shape = 's32[1]{0}', space=sflag, size = 0x4, scoped, tag = 'scoped memory for tpu_custom_call.1']
    #allocation7 [shape = 'u8[4096]{0}', space=vmem, size = 0x1000, scoped, tag = 'input window, operand 6, single buffered']
    #allocation8 [shape = 'u8[8192]{0}', space=vmem, size = 0x2000, scoped, tag = 'output window, operand 0']
    %18 = vsyncpa [#allocation3], 0
    %s19 = scalar_lea.sflag [#allocation3], 1
    %20 = vsyncpa %s19, 0
    %21 = vsyncpa [#allocation6], 0
    %22 = vsyncpa [#allocation4], 0
    %s23 = scalar_lea.sflag [#allocation4], 1
    %24 = vsyncpa %s23, 0
    loop: start=0, step=1, limit=10
    $region2: #{tpu_custom_call.1} parent=1 // loop_pre_header
      _
    $region3: #{tpu_custom_call.1} parent=1 // loop_header
      %s26 = sphi 0, %s30
      %p27 = scmp.ge.s32.totalorder %s26, 10
      %s36 = sphi 0, %s38
      %s39 = sphi 0, %s36
      %s40 = sphi 0, %s39
      %s56 = sphi 0, %s40
      %s60 = sphi 0, %s60
      %s62 = sphi 0, %s60
      %s63 = sphi 0, %s62
      %s77 = sphi 0, %s63
      %s81 = sphi 0, %s81
      %s83 = sphi 0, %s81
      %s84 = sphi 0, %s83
      %s98 = sphi 0, %s84
      %s102 = sphi 0, %s102
      %s104 = sphi 0, %s102
      %s105 = sphi 0, %s104
      %s119 = sphi 0, %s105
      %s123 = sphi 0, %s123
      %s125 = sphi 0, %s123
      %s126 = sphi 0, %s125
      %s140 = sphi 0, %s126
      %s144 = sphi 0, %s144
      %s146 = sphi 0, %s144
      %s147 = sphi 0, %s146
      %s161 = sphi 0, %s147
      %s165 = sphi 0, %s165
      %s167 = sphi 0, %s165
      %s168 = sphi 0, %s167
      %s182 = sphi 0, %s168
      %s186 = sphi 0, %s186
      %s188 = sphi 0, %s186
      %s189 = sphi 0, %s188
      %s203 = sphi 0, %s189
      %s207 = sphi 0, %s207
      %s209 = sphi 0, %s207
      %s210 = sphi 0, %s209
      %s224 = sphi 0, %s210
      %s228 = sphi 0, %s228
      %s230 = sphi 0, %s228
      %s231 = sphi 0, %s230
      %s245 = sphi 0, %s231
      %s249 = sphi 0, %s249
      %s251 = sphi 0, %s249
      %s252 = sphi 0, %s251
      %s266 = sphi 0, %s252
      %s270 = sphi 0, %s270
      %s272 = sphi 0, %s270
      %s273 = sphi 0, %s272
      %s287 = sphi 0, %s273
      %s291 = sphi 0, %s291
      %s293 = sphi 0, %s291
      %s294 = sphi 0, %s293
      %s308 = sphi 0, %s294
      %s314 = sphi 0, %s316
      %s317 = sphi 0, %s314
      %s318 = sphi 0, %s317
      %s334 = sphi 0, %s318
    $region4: #{tpu_custom_call.1} parent=1 // loop_header_branch
      %29 = sbr.rel (%p27) target = $region8
    $region5: #{tpu_custom_call.1} parent=1 // loop_body
      %s31 = ssub.s32 %s26, 1
      %s32 = ssub.s32 %s26, 2
      %s33 = sadd.s32 %s26, 1
      %s34 = ssub.s32 %s26, %s33
      %p35 = scmp.eq.s32.totalorder %s34, 0
      %s37 = sadd.s32 %s36, 1
      %s38 = scalar_select %p35, %s36, %s37
      %p41 = pneg %p35
      %p42 = scmp.eq.s32.totalorder %s26, 7
      %p43 = por %p41, %p42
      %p44 = scmp.ne.s32.totalorder %s36, %s39
      %p45 = scmp.eq.s32.totalorder %s26, 0
      %p46 = por %p44, %p45
      %p47 = scmp.ne.s32.totalorder %s36, %s39
      %p48 = scmp.eq.s32.totalorder %s31, 7
      %p49 = por %p47, %p48
      %p50 = scmp.ne.s32.totalorder %s39, %s40
      %p51 = scmp.eq.s32.totalorder %s31, 0
      %p52 = por %p50, %p51
      %p53 = scmp.ne.s32.totalorder %s39, %s40
      %p54 = scmp.eq.s32.totalorder %s32, 7
      %p55 = por %p53, %p54
      %p57 = scmp.ne.s32.totalorder %s40, %s56
      %p58 = scmp.eq.s32.totalorder %s32, 0
      %p59 = por %p57, %p58
      %s61 = sadd.s32 %s60, 1
      %p64 = scmp.eq.s32.totalorder %s26, 7
      %p65 = scmp.ne.s32.totalorder %s60, %s62
      %p66 = scmp.eq.s32.totalorder %s26, 0
      %p67 = por %p65, %p66
      %p68 = scmp.ne.s32.totalorder %s60, %s62
      %p69 = scmp.eq.s32.totalorder %s31, 7
      %p70 = por %p68, %p69
      %p71 = scmp.ne.s32.totalorder %s62, %s63
      %p72 = scmp.eq.s32.totalorder %s31, 0
      %p73 = por %p71, %p72
      %p74 = scmp.ne.s32.totalorder %s62, %s63
      %p75 = scmp.eq.s32.totalorder %s32, 7
      %p76 = por %p74, %p75
      %p78 = scmp.ne.s32.totalorder %s63, %s77
      %p79 = scmp.eq.s32.totalorder %s32, 0
      %p80 = por %p78, %p79
      %s82 = sadd.s32 %s81, 1
      %p85 = scmp.eq.s32.totalorder %s26, 7
      %p86 = scmp.ne.s32.totalorder %s81, %s83
      %p87 = scmp.eq.s32.totalorder %s26, 0
      %p88 = por %p86, %p87
      %p89 = scmp.ne.s32.totalorder %s81, %s83
      %p90 = scmp.eq.s32.totalorder %s31, 7
      %p91 = por %p89, %p90
      %p92 = scmp.ne.s32.totalorder %s83, %s84
      %p93 = scmp.eq.s32.totalorder %s31, 0
      %p94 = por %p92, %p93
      %p95 = scmp.ne.s32.totalorder %s83, %s84
      %p96 = scmp.eq.s32.totalorder %s32, 7
      %p97 = por %p95, %p96
      %p99 = scmp.ne.s32.totalorder %s84, %s98
      %p100 = scmp.eq.s32.totalorder %s32, 0
      %p101 = por %p99, %p100
      %s103 = sadd.s32 %s102, 1
      %p106 = scmp.eq.s32.totalorder %s26, 7
      %p107 = scmp.ne.s32.totalorder %s102, %s104
      %p108 = scmp.eq.s32.totalorder %s26, 0
      %p109 = por %p107, %p108
      %p110 = scmp.ne.s32.totalorder %s102, %s104
      %p111 = scmp.eq.s32.totalorder %s31, 7
      %p112 = por %p110, %p111
      %p113 = scmp.ne.s32.totalorder %s104, %s105
      %p114 = scmp.eq.s32.totalorder %s31, 0
      %p115 = por %p113, %p114
      %p116 = scmp.ne.s32.totalorder %s104, %s105
      %p117 = scmp.eq.s32.totalorder %s32, 7
      %p118 = por %p116, %p117
      %p120 = scmp.ne.s32.totalorder %s105, %s119
      %p121 = scmp.eq.s32.totalorder %s32, 0
      %p122 = por %p120, %p121
      %s124 = sadd.s32 %s123, 1
      %p127 = scmp.eq.s32.totalorder %s26, 7
      %p128 = scmp.ne.s32.totalorder %s123, %s125
      %p129 = scmp.eq.s32.totalorder %s26, 0
      %p130 = por %p128, %p129
      %p131 = scmp.ne.s32.totalorder %s123, %s125
      %p132 = scmp.eq.s32.totalorder %s31, 7
      %p133 = por %p131, %p132
      %p134 = scmp.ne.s32.totalorder %s125, %s126
      %p135 = scmp.eq.s32.totalorder %s31, 0
      %p136 = por %p134, %p135
      %p137 = scmp.ne.s32.totalorder %s125, %s126
      %p138 = scmp.eq.s32.totalorder %s32, 7
      %p139 = por %p137, %p138
      %p141 = scmp.ne.s32.totalorder %s126, %s140
      %p142 = scmp.eq.s32.totalorder %s32, 0
      %p143 = por %p141, %p142
      %s145 = sadd.s32 %s144, 1
      %p148 = scmp.eq.s32.totalorder %s26, 7
      %p149 = scmp.ne.s32.totalorder %s144, %s146
      %p150 = scmp.eq.s32.totalorder %s26, 0
      %p151 = por %p149, %p150
      %p152 = scmp.ne.s32.totalorder %s144, %s146
      %p153 = scmp.eq.s32.totalorder %s31, 7
      %p154 = por %p152, %p153
      %p155 = scmp.ne.s32.totalorder %s146, %s147
      %p156 = scmp.eq.s32.totalorder %s31, 0
      %p157 = por %p155, %p156
      %p158 = scmp.ne.s32.totalorder %s146, %s147
      %p159 = scmp.eq.s32.totalorder %s32, 7
      %p160 = por %p158, %p159
      %p162 = scmp.ne.s32.totalorder %s147, %s161
      %p163 = scmp.eq.s32.totalorder %s32, 0
      %p164 = por %p162, %p163
      %s166 = sadd.s32 %s165, 1
      %p169 = scmp.eq.s32.totalorder %s26, 7
      %p170 = scmp.ne.s32.totalorder %s165, %s167
      %p171 = scmp.eq.s32.totalorder %s26, 0
      %p172 = por %p170, %p171
      %p173 = scmp.ne.s32.totalorder %s165, %s167
      %p174 = scmp.eq.s32.totalorder %s31, 7
      %p175 = por %p173, %p174
      %p176 = scmp.ne.s32.totalorder %s167, %s168
      %p177 = scmp.eq.s32.totalorder %s31, 0
      %p178 = por %p176, %p177
      %p179 = scmp.ne.s32.totalorder %s167, %s168
      %p180 = scmp.eq.s32.totalorder %s32, 7
      %p181 = por %p179, %p180
      %p183 = scmp.ne.s32.totalorder %s168, %s182
      %p184 = scmp.eq.s32.totalorder %s32, 0
      %p185 = por %p183, %p184
      %s187 = sadd.s32 %s186, 1
      %p190 = scmp.eq.s32.totalorder %s26, 7
      %p191 = scmp.ne.s32.totalorder %s186, %s188
      %p192 = scmp.eq.s32.totalorder %s26, 0
      %p193 = por %p191, %p192
      %p194 = scmp.ne.s32.totalorder %s186, %s188
      %p195 = scmp.eq.s32.totalorder %s31, 7
      %p196 = por %p194, %p195
      %p197 = scmp.ne.s32.totalorder %s188, %s189
      %p198 = scmp.eq.s32.totalorder %s31, 0
      %p199 = por %p197, %p198
      %p200 = scmp.ne.s32.totalorder %s188, %s189
      %p201 = scmp.eq.s32.totalorder %s32, 7
      %p202 = por %p200, %p201
      %p204 = scmp.ne.s32.totalorder %s189, %s203
      %p205 = scmp.eq.s32.totalorder %s32, 0
      %p206 = por %p204, %p205
      %s208 = sadd.s32 %s207, 1
      %p211 = scmp.eq.s32.totalorder %s26, 7
      %p212 = scmp.ne.s32.totalorder %s207, %s209
      %p213 = scmp.eq.s32.totalorder %s26, 0
      %p214 = por %p212, %p213
      %p215 = scmp.ne.s32.totalorder %s207, %s209
      %p216 = scmp.eq.s32.totalorder %s31, 7
      %p217 = por %p215, %p216
      %p218 = scmp.ne.s32.totalorder %s209, %s210
      %p219 = scmp.eq.s32.totalorder %s31, 0
      %p220 = por %p218, %p219
      %p221 = scmp.ne.s32.totalorder %s209, %s210
      %p222 = scmp.eq.s32.totalorder %s32, 7
      %p223 = por %p221, %p222
      %p225 = scmp.ne.s32.totalorder %s210, %s224
      %p226 = scmp.eq.s32.totalorder %s32, 0
      %p227 = por %p225, %p226
      %s229 = sadd.s32 %s228, 1
      %p232 = scmp.eq.s32.totalorder %s26, 7
      %p233 = scmp.ne.s32.totalorder %s228, %s230
      %p234 = scmp.eq.s32.totalorder %s26, 0
      %p235 = por %p233, %p234
      %p236 = scmp.ne.s32.totalorder %s228, %s230
      %p237 = scmp.eq.s32.totalorder %s31, 7
      %p238 = por %p236, %p237
      %p239 = scmp.ne.s32.totalorder %s230, %s231
      %p240 = scmp.eq.s32.totalorder %s31, 0
      %p241 = por %p239, %p240
      %p242 = scmp.ne.s32.totalorder %s230, %s231
      %p243 = scmp.eq.s32.totalorder %s32, 7
      %p244 = por %p242, %p243
      %p246 = scmp.ne.s32.totalorder %s231, %s245
      %p247 = scmp.eq.s32.totalorder %s32, 0
      %p248 = por %p246, %p247
      %s250 = sadd.s32 %s249, 1
      %p253 = scmp.eq.s32.totalorder %s26, 7
      %p254 = scmp.ne.s32.totalorder %s249, %s251
      %p255 = scmp.eq.s32.totalorder %s26, 0
      %p256 = por %p254, %p255
      %p257 = scmp.ne.s32.totalorder %s249, %s251
      %p258 = scmp.eq.s32.totalorder %s31, 7
      %p259 = por %p257, %p258
      %p260 = scmp.ne.s32.totalorder %s251, %s252
      %p261 = scmp.eq.s32.totalorder %s31, 0
      %p262 = por %p260, %p261
      %p263 = scmp.ne.s32.totalorder %s251, %s252
      %p264 = scmp.eq.s32.totalorder %s32, 7
      %p265 = por %p263, %p264
      %p267 = scmp.ne.s32.totalorder %s252, %s266
      %p268 = scmp.eq.s32.totalorder %s32, 0
      %p269 = por %p267, %p268
      %s271 = sadd.s32 %s270, 1
      %p274 = scmp.eq.s32.totalorder %s26, 7
      %p275 = scmp.ne.s32.totalorder %s270, %s272
      %p276 = scmp.eq.s32.totalorder %s26, 0
      %p277 = por %p275, %p276
      %p278 = scmp.ne.s32.totalorder %s270, %s272
      %p279 = scmp.eq.s32.totalorder %s31, 7
      %p280 = por %p278, %p279
      %p281 = scmp.ne.s32.totalorder %s272, %s273
      %p282 = scmp.eq.s32.totalorder %s31, 0
      %p283 = por %p281, %p282
      %p284 = scmp.ne.s32.totalorder %s272, %s273
      %p285 = scmp.eq.s32.totalorder %s32, 7
      %p286 = por %p284, %p285
      %p288 = scmp.ne.s32.totalorder %s273, %s287
      %p289 = scmp.eq.s32.totalorder %s32, 0
      %p290 = por %p288, %p289
      %s292 = sadd.s32 %s291, 1
      %p295 = scmp.eq.s32.totalorder %s26, 7
      %p296 = scmp.ne.s32.totalorder %s291, %s293
      %p297 = scmp.eq.s32.totalorder %s26, 0
      %p298 = por %p296, %p297
      %p299 = scmp.ne.s32.totalorder %s291, %s293
      %p300 = scmp.eq.s32.totalorder %s31, 7
      %p301 = por %p299, %p300
      %p302 = scmp.ne.s32.totalorder %s293, %s294
      %p303 = scmp.eq.s32.totalorder %s31, 0
      %p304 = por %p302, %p303
      %p305 = scmp.ne.s32.totalorder %s293, %s294
      %p306 = scmp.eq.s32.totalorder %s32, 7
      %p307 = por %p305, %p306
      %p309 = scmp.ne.s32.totalorder %s294, %s308
      %p310 = scmp.eq.s32.totalorder %s32, 0
      %p311 = por %p309, %p310
      %s312 = ssub.s32 %s26, %s33
      %p313 = scmp.eq.s32.totalorder %s312, 0
      %s315 = sadd.s32 %s314, 1
      %s316 = scalar_select %p313, %s314, %s315
      %p319 = pneg %p313
      %p320 = scmp.eq.s32.totalorder %s26, 7
      %p321 = por %p319, %p320
      %p322 = scmp.ne.s32.totalorder %s314, %s317
      %p323 = scmp.eq.s32.totalorder %s26, 0
      %p324 = por %p322, %p323
      %p325 = scmp.ne.s32.totalorder %s314, %s317
      %p326 = scmp.eq.s32.totalorder %s31, 7
      %p327 = por %p325, %p326
      %p328 = scmp.ne.s32.totalorder %s317, %s318
      %p329 = scmp.eq.s32.totalorder %s31, 0
      %p330 = por %p328, %p329
      %p331 = scmp.ne.s32.totalorder %s317, %s318
      %p332 = scmp.eq.s32.totalorder %s32, 7
      %p333 = por %p331, %p332
      %p335 = scmp.ne.s32.totalorder %s318, %s334
      %p336 = scmp.eq.s32.totalorder %s32, 0
      %p337 = por %p335, %p336
      %p338 = scmp.le.s32.totalorder 1, %s26
      %p339 = scmp.lt.s32.totalorder %s26, 9
      %p340 = pnand %p338, %p339
      %p341 = pneg %p340
      // Predicated region
      $region9: #{tpu_custom_call.1} parent=5 // pred_check
        _
      $region10: #{tpu_custom_call.1} parent=5 // pred_check_branch
        %343 = sbr.rel (%p340) target = $region12
      $region11: #{tpu_custom_call.1} parent=5 // pred_region
        %s344 = ssub.s32 %s26, 1
        // Predicated region
        $region13: #{tpu_custom_call.1} parent=11 // pred_check
          %p345 = pneg %p73
        $region14: #{tpu_custom_call.1} parent=11 // pred_check_branch
          %347 = sbr.rel (%p345) target = $region16
        $region15: #{tpu_custom_call.1} parent=11 // pred_region
          _
        $region16: #{tpu_custom_call.1} parent=11 // pred_fallthru
          _
        // Predicated region
        $region17: #{tpu_custom_call.1} parent=11 // pred_check
          %p348 = pneg %p94
        $region18: #{tpu_custom_call.1} parent=11 // pred_check_branch
          %350 = sbr.rel (%p348) target = $region20
        $region19: #{tpu_custom_call.1} parent=11 // pred_region
          %s352 = ssub.s32 256, 256
          %353 = vsyncadd [#allocation6], %s352
          %s354 = sshll.u32 [#allocation5], 4
          %s355 = int_to_ptr.vmem [resolvable:$true] %s354
          %360 = dma.hbm_to_vmem [thread:$0]  %s2, 256, %s355, [#allocation6], 128, 128, 8
        $region20: #{tpu_custom_call.1} parent=11 // pred_fallthru
          _
        // Predicated region
        $region21: #{tpu_custom_call.1} parent=11 // pred_check
          %p361 = pneg %p115
        $region22: #{tpu_custom_call.1} parent=11 // pred_check_branch
          %363 = sbr.rel (%p361) target = $region24
        $region23: #{tpu_custom_call.1} parent=11 // pred_region
          _
        $region24: #{tpu_custom_call.1} parent=11 // pred_fallthru
          _
        // Predicated region
        $region25: #{tpu_custom_call.1} parent=11 // pred_check
          %p364 = pneg %p136
        $region26: #{tpu_custom_call.1} parent=11 // pred_check_branch
          %366 = sbr.rel (%p364) target = $region28
        $region27: #{tpu_custom_call.1} parent=11 // pred_region
          _
        $region28: #{tpu_custom_call.1} parent=11 // pred_fallthru
          _
        // Predicated region
        $region29: #{tpu_custom_call.1} parent=11 // pred_check
          %p367 = pneg %p157
        $region30: #{tpu_custom_call.1} parent=11 // pred_check_branch
          %369 = sbr.rel (%p367) target = $region32
        $region31: #{tpu_custom_call.1} parent=11 // pred_region
          _
        $region32: #{tpu_custom_call.1} parent=11 // pred_fallthru
          _
        // Predicated region
        $region33: #{tpu_custom_call.1} parent=11 // pred_check
          %p370 = pneg %p178
        $region34: #{tpu_custom_call.1} parent=11 // pred_check_branch
          %372 = sbr.rel (%p370) target = $region36
        $region35: #{tpu_custom_call.1} parent=11 // pred_region
          %s374 = ssub.s32 128, 128
          %375 = vsyncadd [#allocation6], %s374
          %s376 = sshll.u32 [#allocation7], 4
          %s377 = int_to_ptr.vmem [resolvable:$true] %s376
          %382 = dma.hbm_to_vmem [thread:$0]  %s6, 128, %s377, [#allocation6], 64, 64, 4
        $region36: #{tpu_custom_call.1} parent=11 // pred_fallthru
          _
        // Predicated region
        $region37: #{tpu_custom_call.1} parent=11 // pred_check
          %p383 = pneg %p199
        $region38: #{tpu_custom_call.1} parent=11 // pred_check_branch
          %385 = sbr.rel (%p383) target = $region40
        $region39: #{tpu_custom_call.1} parent=11 // pred_region
          _
        $region40: #{tpu_custom_call.1} parent=11 // pred_fallthru
          _
        // Predicated region
        $region41: #{tpu_custom_call.1} parent=11 // pred_check
          %p386 = pneg %p220
        $region42: #{tpu_custom_call.1} parent=11 // pred_check_branch
          %388 = sbr.rel (%p386) target = $region44
        $region43: #{tpu_custom_call.1} parent=11 // pred_region
          _
        $region44: #{tpu_custom_call.1} parent=11 // pred_fallthru
          _
        // Predicated region
        $region45: #{tpu_custom_call.1} parent=11 // pred_check
          %p389 = pneg %p241
        $region46: #{tpu_custom_call.1} parent=11 // pred_check_branch
          %391 = sbr.rel (%p389) target = $region48
        $region47: #{tpu_custom_call.1} parent=11 // pred_region
          _
        $region48: #{tpu_custom_call.1} parent=11 // pred_fallthru
          _
        // Predicated region
        $region49: #{tpu_custom_call.1} parent=11 // pred_check
          %p392 = pneg %p262
        $region50: #{tpu_custom_call.1} parent=11 // pred_check_branch
          %394 = sbr.rel (%p392) target = $region52
        $region51: #{tpu_custom_call.1} parent=11 // pred_region
          _
        $region52: #{tpu_custom_call.1} parent=11 // pred_fallthru
          _
        // Predicated region
        $region53: #{tpu_custom_call.1} parent=11 // pred_check
          %p395 = pneg %p283
        $region54: #{tpu_custom_call.1} parent=11 // pred_check_branch
          %397 = sbr.rel (%p395) target = $region56
        $region55: #{tpu_custom_call.1} parent=11 // pred_region
          _
        $region56: #{tpu_custom_call.1} parent=11 // pred_fallthru
          _
        // Predicated region
        $region57: #{tpu_custom_call.1} parent=11 // pred_check
          %p398 = pneg %p304
        $region58: #{tpu_custom_call.1} parent=11 // pred_check_branch
          %400 = sbr.rel (%p398) target = $region60
        $region59: #{tpu_custom_call.1} parent=11 // pred_region
          _
        $region60: #{tpu_custom_call.1} parent=11 // pred_fallthru
          _
      $region12: #{tpu_custom_call.1} parent=5 // pred_fallthru
        _
      %p401 = scmp.lt.s32.totalorder %s26, 8
      // Predicated region
      $region61: #{tpu_custom_call.1} parent=5 // pred_check
        %p402 = pneg %p401
      $region62: #{tpu_custom_call.1} parent=5 // pred_check_branch
        %404 = sbr.rel (%p402) target = $region64
      $region63: #{tpu_custom_call.1} parent=5 // pred_region
        // Predicated region
        $region65: #{tpu_custom_call.1} parent=63 // pred_check
          %p405 = pneg %p46
        $region66: #{tpu_custom_call.1} parent=63 // pred_check_branch
          %407 = sbr.rel (%p405) target = $region68
        $region67: #{tpu_custom_call.1} parent=63 // pred_region
          %s408 = sand.u32 %s36, 1
          %s409 = scalar_lea.sflag [#allocation3], %s408
          %s410 = sand.u32 %s36, 1
          %s411 = smul.addr %s410, 8
          %s412 = scalar_lea.vmem [#allocation2], %s411
          %s414 = ssub.s32 128, 128
          %415 = vsyncadd %s409, %s414
          %s416 = smul.addr %s26, 2
          %s417 = smul.addr %s416, 64
          %s418 = scalar_lea.hbm %s0, %s417
          %s419 = sshll.u32 %s412, 4
          %s420 = int_to_ptr.vmem [resolvable:$true] %s419
          %425 = dma.hbm_to_vmem [thread:$0]  %s418, 128, %s420, %s409, 64, 64, 4
        $region68: #{tpu_custom_call.1} parent=63 // pred_fallthru
          _
      $region64: #{tpu_custom_call.1} parent=5 // pred_fallthru
        _
      %p426 = scmp.le.s32.totalorder 1, %s26
      %p427 = scmp.lt.s32.totalorder %s26, 9
      %p428 = pnand %p426, %p427
      %p429 = pneg %p428
      // Predicated region
      $region69: #{tpu_custom_call.1} parent=5 // pred_check
        _
      $region70: #{tpu_custom_call.1} parent=5 // pred_check_branch
        %431 = sbr.rel (%p428) target = $region72
      $region71: #{tpu_custom_call.1} parent=5 // pred_region
        %s432 = ssub.s32 %s26, 1
        %s433 = sand.u32 %s39, 1
        %s434 = scalar_lea.sflag [#allocation3], %s433
        %s435 = sand.u32 %s39, 1
        %s436 = smul.addr %s435, 8
        %s437 = scalar_lea.vmem [#allocation2], %s436
        // Predicated region
        $region73: #{tpu_custom_call.1} parent=71 // pred_check
          %p438 = pneg %p52
        $region74: #{tpu_custom_call.1} parent=71 // pred_check_branch
          %440 = sbr.rel (%p438) target = $region76
        $region75: #{tpu_custom_call.1} parent=71 // pred_region
          %441 = dma.done %s434, 128
        $region76: #{tpu_custom_call.1} parent=71 // pred_fallthru
          _
        // Predicated region
        $region77: #{tpu_custom_call.1} parent=71 // pred_check
          %p442 = pneg %p94
        $region78: #{tpu_custom_call.1} parent=71 // pred_check_branch
          %444 = sbr.rel (%p442) target = $region80
        $region79: #{tpu_custom_call.1} parent=71 // pred_region
          %445 = dma.done [#allocation6], 256
        $region80: #{tpu_custom_call.1} parent=71 // pred_fallthru
          _
        // Predicated region
        $region81: #{tpu_custom_call.1} parent=71 // pred_check
          %p446 = pneg %p178
        $region82: #{tpu_custom_call.1} parent=71 // pred_check_branch
          %448 = sbr.rel (%p446) target = $region84
        $region83: #{tpu_custom_call.1} parent=71 // pred_region
          %449 = dma.done [#allocation6], 128
        $region84: #{tpu_custom_call.1} parent=71 // pred_fallthru
          _
        %s450 = sand.u32 %s39, 1
        %s451 = scalar_lea.sflag [#allocation3], %s450
        %s452 = sand.u32 %s39, 1
        %s453 = smul.addr %s452, 8
        %s454 = scalar_lea.vmem [#allocation2], %s453
        %p455 = pneg %p52
        %p456 = pneg %p49
        %p457 = pneg %p73
        %p458 = pneg %p70
        %p459 = pneg %p94
        %p460 = pneg %p91
        %p461 = pneg %p115
        %p462 = pneg %p112
        %p463 = pneg %p136
        %p464 = pneg %p133
        %p465 = pneg %p157
        %p466 = pneg %p154
        %p467 = pneg %p178
        %p468 = pneg %p175
        %p469 = pneg %p199
        %p470 = pneg %p196
        %p471 = pneg %p220
        %p472 = pneg %p217
        %p473 = pneg %p241
        %p474 = pneg %p238
        %p475 = pneg %p262
        %p476 = pneg %p259
        %p477 = pneg %p283
        %p478 = pneg %p280
        %p479 = pneg %p304
        %p480 = pneg %p301
        %p481 = pneg %p330
        %p482 = pneg %p327
        %s483 = sand.u32 %s317, 1
        %s484 = scalar_lea.sflag [#allocation4], %s483
        %s485 = sand.u32 %s317, 1
        %s486 = smul.addr %s485, 8
        %s487 = scalar_lea.vmem [#allocation8], %s486
        %v489 = vld [vmem:[%s437] sm:$0xf]
        %v490 = vld [vmem:[%s437 + $0x4] sm:$0xf]
        %v491 = vld [vmem:[%s3] sm:$0xf]
        %v492 = vld [vmem:[%s3 + $0x4] sm:$0xf]
        %v495 = vunpack.c.l.b16 %v489
        %v496 = vunpack.c.l.b16 %v490
        %v497 = vpack.c.b16 %v496, %v495
        %v500 = vunpack.c.l.b16 %v491
        %v501 = vunpack.c.l.b16 %v492
        %v502 = vpack.c.b16 %v501, %v500
        %vm504 = vcmask 130048
        %v506 = vsel %vm504, %v497, 0
        %508 = vmatprep.subr.bf16.mxu0 0
        %509 = vmatpush1.bf16.msra.mxu0 %v502
        %510 = vmatprep.subr.bf16.mxu0 0
        %511 = vmatpush1.bf16.msra.mxu0 0
        %512 = vmatprep.subr.bf16.mxu0 0
        %513 = vmatpush1.bf16.msra.mxu0 0
        %514 = vmatprep.subr.bf16.mxu0 0
        %515 = vmatpush1.bf16.msra.mxu0 0
        %516 = vmatprep.subr.bf16.mxu0 0
        %517 = vmatpush1.bf16.msra.mxu0 0
        %518 = vmatprep.subr.bf16.mxu0 0
        %519 = vmatpush1.bf16.msra.mxu0 0
        %520 = vmatprep.subr.bf16.mxu0 0
        %521 = vmatpush1.bf16.msra.mxu0 0
        %522 = vmatprep.subr.bf16.mxu0 0
        %523 = vmatpush1.bf16.msra.mxu0 0
        %524 = vmatprep.subr.bf16.mxu0 0
        %525 = vmatpush1.bf16.msra.mxu0 0
        %526 = vmatprep.subr.bf16.mxu0 0
        %527 = vmatpush1.bf16.msra.mxu0 0
        %528 = vmatprep.subr.bf16.mxu0 0
        %529 = vmatpush1.bf16.msra.mxu0 0
        %530 = vmatprep.subr.bf16.mxu0 0
        %531 = vmatpush1.bf16.msra.mxu0 0
        %532 = vmatprep.subr.bf16.mxu0 0
        %533 = vmatpush1.bf16.msra.mxu0 0
        %534 = vmatprep.subr.bf16.mxu0 0
        %535 = vmatpush1.bf16.msra.mxu0 0
        %536 = vmatprep.subr.bf16.mxu0 0
        %537 = vmatpush1.bf16.msra.mxu0 0
        %538 = vmatprep.subr.bf16.mxu0 0
        %539 = vmatpush1.bf16.msra.mxu0 0
        %540 = vmatprep.mubr.bf16.mxu0 0
        %541 = vmatmul.mubr.bf16.gmra.mrb[0].mxu0 %v506
        %v542 = vpop.f32.mrb[0].mxu0
        %v543 = vadd.f32 0.0, %v542
        %v544 = vpop.f32.mrb[0].mxu0
        %v545 = vpop.f32.mrb[0].mxu0
        %v546 = vadd.f32 0.0, %v545
        %v547 = vpop.f32.mrb[0].mxu0
        %548 = vdwg.mxu0
        %v549 = vld [vmem:[%s4] sm:$0xf]
        %v550 = vld [vmem:[%s4 + $0x4] sm:$0xf]
        %v553 = vunpack.c.l.b16 %v549
        %v554 = vunpack.c.l.b16 %v550
        %v555 = vpack.c.b16 %v554, %v553
        %557 = vmatprep.subr.bf16.mxu0 0
        %558 = vmatpush1.bf16.msra.mxu0 %v555
        %559 = vmatprep.subr.bf16.mxu0 0
        %560 = vmatpush1.bf16.msra.mxu0 0
        %561 = vmatprep.subr.bf16.mxu0 0
        %562 = vmatpush1.bf16.msra.mxu0 0
        %563 = vmatprep.subr.bf16.mxu0 0
        %564 = vmatpush1.bf16.msra.mxu0 0
        %565 = vmatprep.subr.bf16.mxu0 0
        %566 = vmatpush1.bf16.msra.mxu0 0
        %567 = vmatprep.subr.bf16.mxu0 0
        %568 = vmatpush1.bf16.msra.mxu0 0
        %569 = vmatprep.subr.bf16.mxu0 0
        %570 = vmatpush1.bf16.msra.mxu0 0
        %571 = vmatprep.subr.bf16.mxu0 0
        %572 = vmatpush1.bf16.msra.mxu0 0
        %573 = vmatprep.subr.bf16.mxu0 0
        %574 = vmatpush1.bf16.msra.mxu0 0
        %575 = vmatprep.subr.bf16.mxu0 0
        %576 = vmatpush1.bf16.msra.mxu0 0
        %577 = vmatprep.subr.bf16.mxu0 0
        %578 = vmatpush1.bf16.msra.mxu0 0
        %579 = vmatprep.subr.bf16.mxu0 0
        %580 = vmatpush1.bf16.msra.mxu0 0
        %581 = vmatprep.subr.bf16.mxu0 0
        %582 = vmatpush1.bf16.msra.mxu0 0
        %583 = vmatprep.subr.bf16.mxu0 0
        %584 = vmatpush1.bf16.msra.mxu0 0
        %585 = vmatprep.subr.bf16.mxu0 0
        %586 = vmatpush1.bf16.msra.mxu0 0
        %587 = vmatprep.subr.bf16.mxu0 0
        %588 = vmatpush1.bf16.msra.mxu0 0
        %589 = vmatprep.mubr.bf16.mxu0 0
        %590 = vmatmul.mubr.bf16.gmra.mrb[0].mxu0 %v506
        %v591 = vpop.f32.mrb[0].mxu0
        %v592 = vadd.f32 0.0, %v591
        %v593 = vpop.f32.mrb[0].mxu0
        %v594 = vpop.f32.mrb[0].mxu0
        %v595 = vadd.f32 0.0, %v594
        %v596 = vpop.f32.mrb[0].mxu0
        %597 = vdwg.mxu0
        %v598 = vadd.f32 %v543, %v592
        %v599 = vadd.f32 %v546, %v595
        %v600 = vpack.c.bf16 %v599, %v598
        %v601 = vpack.c.bf16 %v546, %v543
        %v602 = vpack.c.bf16 %v595, %v592
        %v603 = vld [vmem:[%s5] sm:$0xf]
        %v604 = vld [vmem:[%s5 + $0x4] sm:$0xf]
        %v607 = vunpack.c.l.b16 %v603
        %v608 = vunpack.c.l.b16 %v604
        %v609 = vpack.c.b16 %v608, %v607
        %v611 = vsel %vm504, %v609, 0
        %613 = vmatprep.subr.bf16.mxu0 0
        %614 = vmatpush1.bf16.msra.mxu0 %v601
        %615 = vmatprep.subr.bf16.mxu0 0
        %616 = vmatpush1.bf16.msra.mxu0 0
        %617 = vmatprep.subr.bf16.mxu0 0
        %618 = vmatpush1.bf16.msra.mxu0 0
        %619 = vmatprep.subr.bf16.mxu0 0
        %620 = vmatpush1.bf16.msra.mxu0 0
        %621 = vmatprep.subr.bf16.mxu0 0
        %622 = vmatpush1.bf16.msra.mxu0 0
        %623 = vmatprep.subr.bf16.mxu0 0
        %624 = vmatpush1.bf16.msra.mxu0 0
        %625 = vmatprep.subr.bf16.mxu0 0
        %626 = vmatpush1.bf16.msra.mxu0 0
        %627 = vmatprep.subr.bf16.mxu0 0
        %628 = vmatpush1.bf16.msra.mxu0 0
        %629 = vmatprep.subr.bf16.mxu0 0
        %630 = vmatpush1.bf16.msra.mxu0 0
        %631 = vmatprep.subr.bf16.mxu0 0
        %632 = vmatpush1.bf16.msra.mxu0 0
        %633 = vmatprep.subr.bf16.mxu0 0
        %634 = vmatpush1.bf16.msra.mxu0 0
        %635 = vmatprep.subr.bf16.mxu0 0
        %636 = vmatpush1.bf16.msra.mxu0 0
        %637 = vmatprep.subr.bf16.mxu0 0
        %638 = vmatpush1.bf16.msra.mxu0 0
        %639 = vmatprep.subr.bf16.mxu0 0
        %640 = vmatpush1.bf16.msra.mxu0 0
        %641 = vmatprep.subr.bf16.mxu0 0
        %642 = vmatpush1.bf16.msra.mxu0 0
        %643 = vmatprep.subr.bf16.mxu0 0
        %644 = vmatpush1.bf16.msra.mxu0 0
        %645 = vmatprep.mubr.bf16.mxu0 0
        %646 = vmatmul.mubr.bf16.gmra.mrb[0].mxu0 %v611
        %v647 = vpop.f32.mrb[0].mxu0
        %v648 = vadd.f32 0.0, %v647
        %v649 = vpop.f32.mrb[0].mxu0
        %v650 = vpop.f32.mrb[0].mxu0
        %v651 = vadd.f32 0.0, %v650
        %v652 = vpop.f32.mrb[0].mxu0
        %653 = vdwg.mxu0
        %v654 = vld [vmem:[#allocation7] sm:$0xf]
        %v655 = vld [vmem:[#allocation7 + $0x4] sm:$0xf]
        %v658 = vunpack.c.l.b16 %v654
        %v659 = vunpack.c.l.b16 %v655
        %v660 = vpack.c.b16 %v659, %v658
        %v662 = vsel %vm504, %v660, 0
        %664 = vmatprep.subr.bf16.mxu0 0
        %665 = vmatpush1.bf16.msra.mxu0 %v602
        %666 = vmatprep.subr.bf16.mxu0 0
        %667 = vmatpush1.bf16.msra.mxu0 0
        %668 = vmatprep.subr.bf16.mxu0 0
        %669 = vmatpush1.bf16.msra.mxu0 0
        %670 = vmatprep.subr.bf16.mxu0 0
        %671 = vmatpush1.bf16.msra.mxu0 0
        %672 = vmatprep.subr.bf16.mxu0 0
        %673 = vmatpush1.bf16.msra.mxu0 0
        %674 = vmatprep.subr.bf16.mxu0 0
        %675 = vmatpush1.bf16.msra.mxu0 0
        %676 = vmatprep.subr.bf16.mxu0 0
        %677 = vmatpush1.bf16.msra.mxu0 0
        %678 = vmatprep.subr.bf16.mxu0 0
        %679 = vmatpush1.bf16.msra.mxu0 0
        %680 = vmatprep.subr.bf16.mxu0 0
        %681 = vmatpush1.bf16.msra.mxu0 0
        %682 = vmatprep.subr.bf16.mxu0 0
        %683 = vmatpush1.bf16.msra.mxu0 0
        %684 = vmatprep.subr.bf16.mxu0 0
        %685 = vmatpush1.bf16.msra.mxu0 0
        %686 = vmatprep.subr.bf16.mxu0 0
        %687 = vmatpush1.bf16.msra.mxu0 0
        %688 = vmatprep.subr.bf16.mxu0 0
        %689 = vmatpush1.bf16.msra.mxu0 0
        %690 = vmatprep.subr.bf16.mxu0 0
        %691 = vmatpush1.bf16.msra.mxu0 0
        %692 = vmatprep.subr.bf16.mxu0 0
        %693 = vmatpush1.bf16.msra.mxu0 0
        %694 = vmatprep.subr.bf16.mxu0 0
        %695 = vmatpush1.bf16.msra.mxu0 0
        %696 = vmatprep.mubr.bf16.mxu0 0
        %697 = vmatmul.mubr.bf16.gmra.mrb[0].mxu0 %v662
        %v698 = vpop.f32.mrb[0].mxu0
        %v699 = vadd.f32 0.0, %v698
        %v700 = vpop.f32.mrb[0].mxu0
        %v701 = vpop.f32.mrb[0].mxu0
        %v702 = vadd.f32 0.0, %v701
        %v703 = vpop.f32.mrb[0].mxu0
        %704 = vdwg.mxu0
        %v705 = vld [vmem:[%s7] sm:$0xf]
        %v706 = vld [vmem:[%s7 + $0x4] sm:$0xf]
        %v709 = vunpack.c.l.b16 %v705
        %v710 = vunpack.c.l.b16 %v706
        %v711 = vpack.c.b16 %v710, %v709
        %v713 = vsel %vm504, %v711, 0
        %715 = vmatprep.subr.bf16.mxu0 0
        %716 = vmatpush1.bf16.msra.mxu0 %v600
        %717 = vmatprep.subr.bf16.mxu0 0
        %718 = vmatpush1.bf16.msra.mxu0 0
        %719 = vmatprep.subr.bf16.mxu0 0
        %720 = vmatpush1.bf16.msra.mxu0 0
        %721 = vmatprep.subr.bf16.mxu0 0
        %722 = vmatpush1.bf16.msra.mxu0 0
        %723 = vmatprep.subr.bf16.mxu0 0
        %724 = vmatpush1.bf16.msra.mxu0 0
        %725 = vmatprep.subr.bf16.mxu0 0
        %726 = vmatpush1.bf16.msra.mxu0 0
        %727 = vmatprep.subr.bf16.mxu0 0
        %728 = vmatpush1.bf16.msra.mxu0 0
        %729 = vmatprep.subr.bf16.mxu0 0
        %730 = vmatpush1.bf16.msra.mxu0 0
        %731 = vmatprep.subr.bf16.mxu0 0
        %732 = vmatpush1.bf16.msra.mxu0 0
        %733 = vmatprep.subr.bf16.mxu0 0
        %734 = vmatpush1.bf16.msra.mxu0 0
        %735 = vmatprep.subr.bf16.mxu0 0
        %736 = vmatpush1.bf16.msra.mxu0 0
        %737 = vmatprep.subr.bf16.mxu0 0
        %738 = vmatpush1.bf16.msra.mxu0 0
        %739 = vmatprep.subr.bf16.mxu0 0
        %740 = vmatpush1.bf16.msra.mxu0 0
        %741 = vmatprep.subr.bf16.mxu0 0
        %742 = vmatpush1.bf16.msra.mxu0 0
        %743 = vmatprep.subr.bf16.mxu0 0
        %744 = vmatpush1.bf16.msra.mxu0 0
        %745 = vmatprep.subr.bf16.mxu0 0
        %746 = vmatpush1.bf16.msra.mxu0 0
        %747 = vmatprep.mubr.bf16.mxu0 0
        %748 = vmatmul.mubr.bf16.gmra.mrb[0].mxu0 %v713
        %v749 = vpop.f32.mrb[0].mxu0
        %v750 = vadd.f32 0.0, %v749
        %v751 = vpop.f32.mrb[0].mxu0
        %v752 = vpop.f32.mrb[0].mxu0
        %v753 = vadd.f32 0.0, %v752
        %v754 = vpop.f32.mrb[0].mxu0
        %755 = vdwg.mxu0
        %v756 = vsub.f32 %v648, %v699
        %v757 = vsub.f32 %v651, %v702
        %v758 = vsub.f32 %v750, %v648
        %v759 = vsub.f32 %v753, %v651
        %v760 = vsub.f32 %v758, %v699
        %v761 = vsub.f32 %v759, %v702
        %v762 = vld [vmem:[%s1] sm:$0xff]
        %v763 = vld [vmem:[%s1 + $0x8] sm:$0xff]
        %v764 = vld [vmem:[#allocation5] sm:$0xff]
        %v765 = vld [vmem:[#allocation5 + $0x8] sm:$0xff]
        %v766 = vmul.f32 %v762, %v756
        %v767 = vmul.f32 %v763, %v757
        %v768 = vmul.f32 %v764, %v760
        %v769 = vmul.f32 %v765, %v761
        %v770 = vsub.f32 %v766, %v768
        %v771 = vsub.f32 %v767, %v769
        %v772 = vmul.f32 %v762, %v760
        %v773 = vmul.f32 %v763, %v761
        %v774 = vmul.f32 %v764, %v756
        %v775 = vmul.f32 %v765, %v757
        %v776 = vadd.f32 %v772, %v774
        %v777 = vadd.f32 %v773, %v775
        %v778 = vadd.f32 %v770, %v776
        %v779 = vadd.f32 %v771, %v777
        %v780 = vpack.c.bf16 %v779, %v778
        %v781 = vpack.c.bf16 %v771, %v770
        %v782 = vpack.c.bf16 %v777, %v776
        %v783 = vld [vmem:[%s8] sm:$0xf]
        %v785 = vsel %vm504, %v783, 0
        %787 = vmatprep.subr.bf16.mxu0 0
        %788 = vmatpush1.bf16.msra.mxu0 %v781
        %789 = vmatprep.subr.bf16.mxu0 0
        %790 = vmatpush1.bf16.msra.mxu0 0
        %791 = vmatprep.subr.bf16.mxu0 0
        %792 = vmatpush1.bf16.msra.mxu0 0
        %793 = vmatprep.subr.bf16.mxu0 0
        %794 = vmatpush1.bf16.msra.mxu0 0
        %795 = vmatprep.subr.bf16.mxu0 0
        %796 = vmatpush1.bf16.msra.mxu0 0
        %797 = vmatprep.subr.bf16.mxu0 0
        %798 = vmatpush1.bf16.msra.mxu0 0
        %799 = vmatprep.subr.bf16.mxu0 0
        %800 = vmatpush1.bf16.msra.mxu0 0
        %801 = vmatprep.subr.bf16.mxu0 0
        %802 = vmatpush1.bf16.msra.mxu0 0
        %803 = vmatprep.subr.bf16.mxu0 0
        %804 = vmatpush1.bf16.msra.mxu0 0
        %805 = vmatprep.subr.bf16.mxu0 0
        %806 = vmatpush1.bf16.msra.mxu0 0
        %807 = vmatprep.subr.bf16.mxu0 0
        %808 = vmatpush1.bf16.msra.mxu0 0
        %809 = vmatprep.subr.bf16.mxu0 0
        %810 = vmatpush1.bf16.msra.mxu0 0
        %811 = vmatprep.subr.bf16.mxu0 0
        %812 = vmatpush1.bf16.msra.mxu0 0
        %813 = vmatprep.subr.bf16.mxu0 0
        %814 = vmatpush1.bf16.msra.mxu0 0
        %815 = vmatprep.subr.bf16.mxu0 0
        %816 = vmatpush1.bf16.msra.mxu0 0
        %817 = vmatprep.subr.bf16.mxu0 0
        %818 = vmatpush1.bf16.msra.mxu0 0
        %819 = vmatprep.mubr.bf16.mxu0 0
        %820 = vmatmul.mubr.bf16.gmra.mrb[0].mxu0 %v785
        %v821 = vpop.f32.mrb[0].mxu0
        %v822 = vadd.f32 0.0, %v821
        %v823 = vpop.f32.mrb[0].mxu0
        %v824 = vpop.f32.mrb[0].mxu0
        %v825 = vpop.f32.mrb[0].mxu0
        %826 = vdwg.mxu0
        %v827 = vld [vmem:[%s9] sm:$0xf]
        %v829 = vsel %vm504, %v827, 0
        %831 = vmatprep.subr.bf16.mxu0 0
        %832 = vmatpush1.bf16.msra.mxu0 %v782
        %833 = vmatprep.subr.bf16.mxu0 0
        %834 = vmatpush1.bf16.msra.mxu0 0
        %835 = vmatprep.subr.bf16.mxu0 0
        %836 = vmatpush1.bf16.msra.mxu0 0
        %837 = vmatprep.subr.bf16.mxu0 0
        %838 = vmatpush1.bf16.msra.mxu0 0
        %839 = vmatprep.subr.bf16.mxu0 0
        %840 = vmatpush1.bf16.msra.mxu0 0
        %841 = vmatprep.subr.bf16.mxu0 0
        %842 = vmatpush1.bf16.msra.mxu0 0
        %843 = vmatprep.subr.bf16.mxu0 0
        %844 = vmatpush1.bf16.msra.mxu0 0
        %845 = vmatprep.subr.bf16.mxu0 0
        %846 = vmatpush1.bf16.msra.mxu0 0
        %847 = vmatprep.subr.bf16.mxu0 0
        %848 = vmatpush1.bf16.msra.mxu0 0
        %849 = vmatprep.subr.bf16.mxu0 0
        %850 = vmatpush1.bf16.msra.mxu0 0
        %851 = vmatprep.subr.bf16.mxu0 0
        %852 = vmatpush1.bf16.msra.mxu0 0
        %853 = vmatprep.subr.bf16.mxu0 0
        %854 = vmatpush1.bf16.msra.mxu0 0
        %855 = vmatprep.subr.bf16.mxu0 0
        %856 = vmatpush1.bf16.msra.mxu0 0
        %857 = vmatprep.subr.bf16.mxu0 0
        %858 = vmatpush1.bf16.msra.mxu0 0
        %859 = vmatprep.subr.bf16.mxu0 0
        %860 = vmatpush1.bf16.msra.mxu0 0
        %861 = vmatprep.subr.bf16.mxu0 0
        %862 = vmatpush1.bf16.msra.mxu0 0
        %863 = vmatprep.mubr.bf16.mxu0 0
        %864 = vmatmul.mubr.bf16.gmra.mrb[0].mxu0 %v829
        %v865 = vpop.f32.mrb[0].mxu0
        %v866 = vadd.f32 0.0, %v865
        %v867 = vpop.f32.mrb[0].mxu0
        %v868 = vpop.f32.mrb[0].mxu0
        %v869 = vpop.f32.mrb[0].mxu0
        %870 = vdwg.mxu0
        %v871 = vld [vmem:[%s10] sm:$0xf]
        %v873 = vsel %vm504, %v871, 0
        %875 = vmatprep.subr.bf16.mxu0 0
        %876 = vmatpush1.bf16.msra.mxu0 %v780
        %877 = vmatprep.subr.bf16.mxu0 0
        %878 = vmatpush1.bf16.msra.mxu0 0
        %879 = vmatprep.subr.bf16.mxu0 0
        %880 = vmatpush1.bf16.msra.mxu0 0
        %881 = vmatprep.subr.bf16.mxu0 0
        %882 = vmatpush1.bf16.msra.mxu0 0
        %883 = vmatprep.subr.bf16.mxu0 0
        %884 = vmatpush1.bf16.msra.mxu0 0
        %885 = vmatprep.subr.bf16.mxu0 0
        %886 = vmatpush1.bf16.msra.mxu0 0
        %887 = vmatprep.subr.bf16.mxu0 0
        %888 = vmatpush1.bf16.msra.mxu0 0
        %889 = vmatprep.subr.bf16.mxu0 0
        %890 = vmatpush1.bf16.msra.mxu0 0
        %891 = vmatprep.subr.bf16.mxu0 0
        %892 = vmatpush1.bf16.msra.mxu0 0
        %893 = vmatprep.subr.bf16.mxu0 0
        %894 = vmatpush1.bf16.msra.mxu0 0
        %895 = vmatprep.subr.bf16.mxu0 0
        %896 = vmatpush1.bf16.msra.mxu0 0
        %897 = vmatprep.subr.bf16.mxu0 0
        %898 = vmatpush1.bf16.msra.mxu0 0
        %899 = vmatprep.subr.bf16.mxu0 0
        %900 = vmatpush1.bf16.msra.mxu0 0
        %901 = vmatprep.subr.bf16.mxu0 0
        %902 = vmatpush1.bf16.msra.mxu0 0
        %903 = vmatprep.subr.bf16.mxu0 0
        %904 = vmatpush1.bf16.msra.mxu0 0
        %905 = vmatprep.subr.bf16.mxu0 0
        %906 = vmatpush1.bf16.msra.mxu0 0
        %907 = vmatprep.mubr.bf16.mxu0 0
        %908 = vmatmul.mubr.bf16.gmra.mrb[0].mxu0 %v873
        %v909 = vpop.f32.mrb[0].mxu0
        %v910 = vadd.f32 0.0, %v909
        %v911 = vpop.f32.mrb[0].mxu0
        %v912 = vpop.f32.mrb[0].mxu0
        %v913 = vpop.f32.mrb[0].mxu0
        %914 = vdwg.mxu0
        %v915 = vsub.f32 %v822, %v866
        %v916 = vpack.c.bf16 %v915, %v915
        %v917 = vsub.f32 %v910, %v822
        %v918 = vsub.f32 %v917, %v866
        %v919 = vpack.c.bf16 %v918, %v918
        %v920 = vld [vmem:[%s11] sm:$0xf]
        %v921 = vld [vmem:[%s11 + $0x4] sm:$0xf]
        %v922 = vld [vmem:[%s12] sm:$0xf]
        %v923 = vld [vmem:[%s12 + $0x4] sm:$0xf]
        %v926 = vunpack.c.l.b16 %v922
        %v927 = vunpack.c.l.b16 %v923
        %v928 = vpack.c.b16 %v927, %v926
        %v931 = vsel %vm504, %v919, 0
        %933 = vmatprep.subr.bf16.mxu0 0
        %934 = vmatpush1.bf16.msra.mxu0 %v928
        %935 = vmatprep.subr.bf16.mxu0 0
        %936 = vmatpush1.bf16.msra.mxu0 0
        %937 = vmatprep.subr.bf16.mxu0 0
        %938 = vmatpush1.bf16.msra.mxu0 0
        %939 = vmatprep.subr.bf16.mxu0 0
        %940 = vmatpush1.bf16.msra.mxu0 0
        %941 = vmatprep.subr.bf16.mxu0 0
        %942 = vmatpush1.bf16.msra.mxu0 0
        %943 = vmatprep.subr.bf16.mxu0 0
        %944 = vmatpush1.bf16.msra.mxu0 0
        %945 = vmatprep.subr.bf16.mxu0 0
        %946 = vmatpush1.bf16.msra.mxu0 0
        %947 = vmatprep.subr.bf16.mxu0 0
        %948 = vmatpush1.bf16.msra.mxu0 0
        %949 = vmatprep.subr.bf16.mxu0 0
        %950 = vmatpush1.bf16.msra.mxu0 0
        %951 = vmatprep.subr.bf16.mxu0 0
        %952 = vmatpush1.bf16.msra.mxu0 0
        %953 = vmatprep.subr.bf16.mxu0 0
        %954 = vmatpush1.bf16.msra.mxu0 0
        %955 = vmatprep.subr.bf16.mxu0 0
        %956 = vmatpush1.bf16.msra.mxu0 0
        %957 = vmatprep.subr.bf16.mxu0 0
        %958 = vmatpush1.bf16.msra.mxu0 0
        %959 = vmatprep.subr.bf16.mxu0 0
        %960 = vmatpush1.bf16.msra.mxu0 0
        %961 = vmatprep.subr.bf16.mxu0 0
        %962 = vmatpush1.bf16.msra.mxu0 0
        %963 = vmatprep.subr.bf16.mxu0 0
        %964 = vmatpush1.bf16.msra.mxu0 0
        %965 = vmatprep.mubr.bf16.mxu0 0
        %966 = vmatmul.mubr.bf16.gmra.mrb[0].mxu0 %v931
        %v967 = vpop.f32.mrb[0].mxu0
        %v968 = vadd.f32 0.0, %v967
        %v969 = vpop.f32.mrb[0].mxu0
        %v970 = vpop.f32.mrb[0].mxu0
        %v971 = vpop.f32.mrb[0].mxu0
        %972 = vdwg.mxu0
        %v975 = vunpack.c.l.b16 %v920
        %v976 = vunpack.c.l.b16 %v921
        %v977 = vpack.c.b16 %v976, %v975
        %v980 = vsel %vm504, %v916, 0
        %982 = vmatprep.subr.bf16.mxu0 0
        %983 = vmatpush1.bf16.msra.mxu0 %v977
        %984 = vmatprep.subr.bf16.mxu0 0
        %985 = vmatpush1.bf16.msra.mxu0 0
        %986 = vmatprep.subr.bf16.mxu0 0
        %987 = vmatpush1.bf16.msra.mxu0 0
        %988 = vmatprep.subr.bf16.mxu0 0
        %989 = vmatpush1.bf16.msra.mxu0 0
        %990 = vmatprep.subr.bf16.mxu0 0
        %991 = vmatpush1.bf16.msra.mxu0 0
        %992 = vmatprep.subr.bf16.mxu0 0
        %993 = vmatpush1.bf16.msra.mxu0 0
        %994 = vmatprep.subr.bf16.mxu0 0
        %995 = vmatpush1.bf16.msra.mxu0 0
        %996 = vmatprep.subr.bf16.mxu0 0
        %997 = vmatpush1.bf16.msra.mxu0 0
        %998 = vmatprep.subr.bf16.mxu0 0
        %999 = vmatpush1.bf16.msra.mxu0 0
        %1000 = vmatprep.subr.bf16.mxu0 0
        %1001 = vmatpush1.bf16.msra.mxu0 0
        %1002 = vmatprep.subr.bf16.mxu0 0
        %1003 = vmatpush1.bf16.msra.mxu0 0
        %1004 = vmatprep.subr.bf16.mxu0 0
        %1005 = vmatpush1.bf16.msra.mxu0 0
        %1006 = vmatprep.subr.bf16.mxu0 0
        %1007 = vmatpush1.bf16.msra.mxu0 0
        %1008 = vmatprep.subr.bf16.mxu0 0
        %1009 = vmatpush1.bf16.msra.mxu0 0
        %1010 = vmatprep.subr.bf16.mxu0 0
        %1011 = vmatpush1.bf16.msra.mxu0 0
        %1012 = vmatprep.subr.bf16.mxu0 0
        %1013 = vmatpush1.bf16.msra.mxu0 0
        %1014 = vmatprep.mubr.bf16.mxu0 0
        %1015 = vmatmul.mubr.bf16.gmra.mrb[0].mxu0 %v980
        %v1016 = vpop.f32.mrb[0].mxu0
        %v1017 = vadd.f32 %v968, %v1016
        %v1018 = vpop.f32.mrb[0].mxu0
        %v1019 = vpop.f32.mrb[0].mxu0
        %v1020 = vpop.f32.mrb[0].mxu0
        %1021 = vdwg.mxu0
        %vm1022 = vcmask 64512
        %1023 = vst.msk [vmem:[%s487] sm:$0xff] %vm1022, %v1017
        %s1024 = sand.u32 %s317, 1
        %s1025 = scalar_lea.sflag [#allocation4], %s1024
        %s1026 = sand.u32 %s317, 1
        %s1027 = smul.addr %s1026, 8
        %s1028 = scalar_lea.vmem [#allocation8], %s1027
        // Predicated region
        $region85: #{tpu_custom_call.1} parent=71 // pred_check
          %p1029 = pneg %p327
        $region86: #{tpu_custom_call.1} parent=71 // pred_check_branch
          %1031 = sbr.rel (%p1029) target = $region88
        $region87: #{tpu_custom_call.1} parent=71 // pred_region
          %s1033 = ssub.s32 128, 128
          %1034 = vsyncadd %s1025, %s1033
          %s1035 = smul.addr %s31, 128
          %s1036 = scalar_lea.hbm %s13, %s1035
          %s1038 = sshll.u32 %s1028, 4
          %s1039 = int_to_ptr.vmem [resolvable:$true] %s1038
          %1041 = dma.vmem_to_hbm [thread:$0]  %s1039, 128, %s1036, %s1025
        $region88: #{tpu_custom_call.1} parent=71 // pred_fallthru
          _
      $region72: #{tpu_custom_call.1} parent=5 // pred_fallthru
        _
      %p1042 = scmp.le.s32.totalorder 2, %s26
      // Predicated region
      $region89: #{tpu_custom_call.1} parent=5 // pred_check
        %p1043 = pneg %p1042
      $region90: #{tpu_custom_call.1} parent=5 // pred_check_branch
        %1045 = sbr.rel (%p1043) target = $region92
      $region91: #{tpu_custom_call.1} parent=5 // pred_region
        %s1046 = ssub.s32 %s26, 2
        // Predicated region
        $region93: #{tpu_custom_call.1} parent=91 // pred_check
          %p1047 = pneg %p333
        $region94: #{tpu_custom_call.1} parent=91 // pred_check_branch
          %1049 = sbr.rel (%p1047) target = $region96
        $region95: #{tpu_custom_call.1} parent=91 // pred_region
          %s1050 = sand.u32 %s318, 1
          %s1051 = scalar_lea.sflag [#allocation4], %s1050
          %s1052 = sand.u32 %s318, 1
          %s1053 = smul.addr %s1052, 8
          %s1054 = scalar_lea.vmem [#allocation8], %s1053
          %1055 = dma.done %s1051, 128
        $region96: #{tpu_custom_call.1} parent=91 // pred_fallthru
          _
      $region92: #{tpu_custom_call.1} parent=5 // pred_fallthru
        _
    $region6: #{tpu_custom_call.1} parent=1 // loop_footer
      %s30 = sadd.s32 1, %s26
    $region7: #{tpu_custom_call.1} parent=1 // loop_footer_branch
      %25 = sbr.rel target = $region3
    $region8: #{tpu_custom_call.1} parent=1 // loop_exit
      _
    %1056 = vsyncpa [#allocation3], 1
    %s1057 = scalar_lea.sflag [#allocation3], 1
    %1058 = vsyncpa %s1057, 1
    %1059 = vsyncpa [#allocation6], 1
    %1060 = vsyncpa [#allocation4], 1
    %s1061 = scalar_lea.sflag [#allocation4], 1
    %1062 = vsyncpa %s1061, 1

// kernel: tpu_custom_call.1
$region0: #{tpu_custom_call.1}
  #allocation0 [shape = 'u32[]', space=smem, size = 0x4, offset = 0x4, fixed_abs, tag = 'smem constant byte address 0x4 - core index']
  #allocation1 [shape = 'u32[144,128]{1,0:T(1,128)}', space=vmem, size = 0x12000, scoped, tag = 'internal scratch']
  %s0 = inlined_call_operand.hbm [shape: bf16[8,16,16], index: 0, kind: input, shape index: {}]
  %s1 = inlined_call_operand.vmem [shape: f32[16,16], index: 1, kind: input, shape index: {}]
  %s2 = inlined_call_operand.hbm [shape: f32[16,16], index: 2, kind: input, shape index: {}]
  %s3 = inlined_call_operand.vmem [shape: bf16[16,16], index: 3, kind: input, shape index: {}]
  %s4 = inlined_call_operand.vmem [shape: bf16[16,16], index: 4, kind: input, shape index: {}]
  %s5 = inlined_call_operand.vmem [shape: bf16[16,16], index: 5, kind: input, shape index: {}]
  %s6 = inlined_call_operand.hbm [shape: bf16[16,16], index: 6, kind: input, shape index: {}]
  %s7 = inlined_call_operand.vmem [shape: bf16[16,16], index: 7, kind: input, shape index: {}]
  %s8 = inlined_call_operand.vmem [shape: bf16[8,16], index: 8, kind: input, shape index: {}]
  %s9 = inlined_call_operand.vmem [shape: bf16[8,16], index: 9, kind: input, shape index: {}]
  %s10 = inlined_call_operand.vmem [shape: bf16[8,16], index: 10, kind: input, shape index: {}]
  %s11 = inlined_call_operand.vmem [shape: bf16[16,8], index: 11, kind: input, shape index: {}]
  %s12 = inlined_call_operand.vmem [shape: bf16[16,8], index: 12, kind: input, shape index: {}]
  %s13 = inlined_call_operand.hbm [shape: f32[8,8,8], index: 13, kind: output, shape index: {}]
  %s14 = sld [smem:[#allocation0]]
  $region97: #{tpu_custom_call.1} parent=0
    _
  %s16 = ssub.s32 1, %s14
  %s17 = scalar_select 0, %s16, %s14
  $region1: #{tpu_custom_call.1} parent=0
    #allocation2 [shape = 'u8[8192]{0}', space=vmem, size = 0x2000, scoped, tag = 'input window, operand 0']
    #allocation3 [shape = 's32[2]{0}', space=sflag, size = 0x8, scoped, tag = 'scoped memory for tpu_custom_call.1']
    #allocation4 [shape = 's32[2]{0}', space=sflag, size = 0x8, scoped, tag = 'scoped memory for tpu_custom_call.1']
    #allocation5 [shape = 'u8[8192]{0}', space=vmem, size = 0x2000, scoped, tag = 'input window, operand 2, single buffered']
    #allocation6 [shape = 's32[1]{0}', space=sflag, size = 0x4, scoped, tag = 'scoped memory for tpu_custom_call.1']
    #allocation7 [shape = 'u8[4096]{0}', space=vmem, size = 0x1000, scoped, tag = 'input window, operand 6, single buffered']
    #allocation8 [shape = 'u8[8192]{0}', space=vmem, size = 0x2000, scoped, tag = 'output window, operand 0']
    %18 = vsyncpa [#allocation3], 0
    %s19 = scalar_lea.sflag [#allocation3], 1
    %20 = vsyncpa %s19, 0
    %21 = vsyncpa [#allocation6], 0
    %22 = vsyncpa [#allocation4], 0
    %s23 = scalar_lea.sflag [#allocation4], 1
    %24 = vsyncpa %s23, 0
    loop: start=0, step=1, limit=10
    $region2: #{tpu_custom_call.1} parent=1 // loop_pre_header
      _
    $region3: #{tpu_custom_call.1} parent=1 // loop_header
      %s26 = sphi 0, %s30
      %p27 = scmp.ge.s32.totalorder %s26, 10
      %s36 = sphi 0, %s38
      %s39 = sphi 0, %s36
      %s40 = sphi 0, %s39
      %s56 = sphi 0, %s40
      %s60 = sphi 0, %s60
      %s62 = sphi 0, %s60
      %s63 = sphi 0, %s62
      %s77 = sphi 0, %s63
      %s81 = sphi 0, %s81
      %s83 = sphi 0, %s81
      %s84 = sphi 0, %s83
      %s98 = sphi 0, %s84
      %s102 = sphi 0, %s102
      %s104 = sphi 0, %s102
      %s105 = sphi 0, %s104
      %s119 = sphi 0, %s105
      %s123 = sphi 0, %s123
      %s125 = sphi 0, %s123
      %s126 = sphi 0, %s125
      %s140 = sphi 0, %s126
      %s144 = sphi 0, %s144
      %s146 = sphi 0, %s144
      %s147 = sphi 0, %s146
      %s161 = sphi 0, %s147
      %s165 = sphi 0, %s165
      %s167 = sphi 0, %s165
      %s168 = sphi 0, %s167
      %s182 = sphi 0, %s168
      %s186 = sphi 0, %s186
      %s188 = sphi 0, %s186
      %s189 = sphi 0, %s188
      %s203 = sphi 0, %s189
      %s207 = sphi 0, %s207
      %s209 = sphi 0, %s207
      %s210 = sphi 0, %s209
      %s224 = sphi 0, %s210
      %s228 = sphi 0, %s228
      %s230 = sphi 0, %s228
      %s231 = sphi 0, %s230
      %s245 = sphi 0, %s231
      %s249 = sphi 0, %s249
      %s251 = sphi 0, %s249
      %s252 = sphi 0, %s251
      %s266 = sphi 0, %s252
      %s270 = sphi 0, %s270
      %s272 = sphi 0, %s270
      %s273 = sphi 0, %s272
      %s287 = sphi 0, %s273
      %s291 = sphi 0, %s291
      %s293 = sphi 0, %s291
      %s294 = sphi 0, %s293
      %s308 = sphi 0, %s294
      %s314 = sphi 0, %s316
      %s317 = sphi 0, %s314
      %s318 = sphi 0, %s317
      %s334 = sphi 0, %s318
    $region4: #{tpu_custom_call.1} parent=1 // loop_header_branch
      %29 = sbr.rel (%p27) target = $region8
    $region5: #{tpu_custom_call.1} parent=1 // loop_body
      %s31 = ssub.s32 %s26, 1
      %s32 = ssub.s32 %s26, 2
      %s33 = sadd.s32 %s26, 1
      %s34 = ssub.s32 %s26, %s33
      %p35 = scmp.eq.s32.totalorder %s34, 0
      %s37 = sadd.s32 %s36, 1
      %s38 = scalar_select %p35, %s36, %s37
      %p41 = pneg %p35
      %p42 = scmp.eq.s32.totalorder %s26, 7
      %p43 = por %p41, %p42
      %p44 = scmp.ne.s32.totalorder %s36, %s39
      %p45 = scmp.eq.s32.totalorder %s26, 0
      %p46 = por %p44, %p45
      %p47 = scmp.ne.s32.totalorder %s36, %s39
      %p48 = scmp.eq.s32.totalorder %s31, 7
      %p49 = por %p47, %p48
      %p50 = scmp.ne.s32.totalorder %s39, %s40
      %p51 = scmp.eq.s32.totalorder %s31, 0
      %p52 = por %p50, %p51
      %p53 = scmp.ne.s32.totalorder %s39, %s40
      %p54 = scmp.eq.s32.totalorder %s32, 7
      %p55 = por %p53, %p54
      %p57 = scmp.ne.s32.totalorder %s40, %s56
      %p58 = scmp.eq.s32.totalorder %s32, 0
      %p59 = por %p57, %p58
      %s61 = sadd.s32 %s60, 1
      %p64 = scmp.eq.s32.totalorder %s26, 7
      %p65 = scmp.ne.s32.totalorder %s60, %s62
      %p66 = scmp.eq.s32.totalorder %s26, 0
      %p67 = por %p65, %p66
      %p68 = scmp.ne.s32.totalorder %s60, %s62
      %p69 = scmp.eq.s32.totalorder %s31, 7
      %p70 = por %p68, %p69
      %p71 = scmp.ne.s32.totalorder %s62, %s63
      %p72 = scmp.eq.s32.totalorder %s31, 0
      %p73 = por %p71, %p72
      %p74 = scmp.ne.s32.totalorder %s62, %s63
      %p75 = scmp.eq.s32.totalorder %s32, 7
      %p76 = por %p74, %p75
      %p78 = scmp.ne.s32.totalorder %s63, %s77
      %p79 = scmp.eq.s32.totalorder %s32, 0
      %p80 = por %p78, %p79
      %s82 = sadd.s32 %s81, 1
      %p85 = scmp.eq.s32.totalorder %s26, 7
      %p86 = scmp.ne.s32.totalorder %s81, %s83
      %p87 = scmp.eq.s32.totalorder %s26, 0
      %p88 = por %p86, %p87
      %p89 = scmp.ne.s32.totalorder %s81, %s83
      %p90 = scmp.eq.s32.totalorder %s31, 7
      %p91 = por %p89, %p90
      %p92 = scmp.ne.s32.totalorder %s83, %s84
      %p93 = scmp.eq.s32.totalorder %s31, 0
      %p94 = por %p92, %p93
      %p95 = scmp.ne.s32.totalorder %s83, %s84
      %p96 = scmp.eq.s32.totalorder %s32, 7
      %p97 = por %p95, %p96
      %p99 = scmp.ne.s32.totalorder %s84, %s98
      %p100 = scmp.eq.s32.totalorder %s32, 0
      %p101 = por %p99, %p100
      %s103 = sadd.s32 %s102, 1
      %p106 = scmp.eq.s32.totalorder %s26, 7
      %p107 = scmp.ne.s32.totalorder %s102, %s104
      %p108 = scmp.eq.s32.totalorder %s26, 0
      %p109 = por %p107, %p108
      %p110 = scmp.ne.s32.totalorder %s102, %s104
      %p111 = scmp.eq.s32.totalorder %s31, 7
      %p112 = por %p110, %p111
      %p113 = scmp.ne.s32.totalorder %s104, %s105
      %p114 = scmp.eq.s32.totalorder %s31, 0
      %p115 = por %p113, %p114
      %p116 = scmp.ne.s32.totalorder %s104, %s105
      %p117 = scmp.eq.s32.totalorder %s32, 7
      %p118 = por %p116, %p117
      %p120 = scmp.ne.s32.totalorder %s105, %s119
      %p121 = scmp.eq.s32.totalorder %s32, 0
      %p122 = por %p120, %p121
      %s124 = sadd.s32 %s123, 1
      %p127 = scmp.eq.s32.totalorder %s26, 7
      %p128 = scmp.ne.s32.totalorder %s123, %s125
      %p129 = scmp.eq.s32.totalorder %s26, 0
      %p130 = por %p128, %p129
      %p131 = scmp.ne.s32.totalorder %s123, %s125
      %p132 = scmp.eq.s32.totalorder %s31, 7
      %p133 = por %p131, %p132
      %p134 = scmp.ne.s32.totalorder %s125, %s126
      %p135 = scmp.eq.s32.totalorder %s31, 0
      %p136 = por %p134, %p135
      %p137 = scmp.ne.s32.totalorder %s125, %s126
      %p138 = scmp.eq.s32.totalorder %s32, 7
      %p139 = por %p137, %p138
      %p141 = scmp.ne.s32.totalorder %s126, %s140
      %p142 = scmp.eq.s32.totalorder %s32, 0
      %p143 = por %p141, %p142
      %s145 = sadd.s32 %s144, 1
      %p148 = scmp.eq.s32.totalorder %s26, 7
      %p149 = scmp.ne.s32.totalorder %s144, %s146
      %p150 = scmp.eq.s32.totalorder %s26, 0
      %p151 = por %p149, %p150
      %p152 = scmp.ne.s32.totalorder %s144, %s146
      %p153 = scmp.eq.s32.totalorder %s31, 7
      %p154 = por %p152, %p153
      %p155 = scmp.ne.s32.totalorder %s146, %s147
      %p156 = scmp.eq.s32.totalorder %s31, 0
      %p157 = por %p155, %p156
      %p158 = scmp.ne.s32.totalorder %s146, %s147
      %p159 = scmp.eq.s32.totalorder %s32, 7
      %p160 = por %p158, %p159
      %p162 = scmp.ne.s32.totalorder %s147, %s161
      %p163 = scmp.eq.s32.totalorder %s32, 0
      %p164 = por %p162, %p163
      %s166 = sadd.s32 %s165, 1
      %p169 = scmp.eq.s32.totalorder %s26, 7
      %p170 = scmp.ne.s32.totalorder %s165, %s167
      %p171 = scmp.eq.s32.totalorder %s26, 0
      %p172 = por %p170, %p171
      %p173 = scmp.ne.s32.totalorder %s165, %s167
      %p174 = scmp.eq.s32.totalorder %s31, 7
      %p175 = por %p173, %p174
      %p176 = scmp.ne.s32.totalorder %s167, %s168
      %p177 = scmp.eq.s32.totalorder %s31, 0
      %p178 = por %p176, %p177
      %p179 = scmp.ne.s32.totalorder %s167, %s168
      %p180 = scmp.eq.s32.totalorder %s32, 7
      %p181 = por %p179, %p180
      %p183 = scmp.ne.s32.totalorder %s168, %s182
      %p184 = scmp.eq.s32.totalorder %s32, 0
      %p185 = por %p183, %p184
      %s187 = sadd.s32 %s186, 1
      %p190 = scmp.eq.s32.totalorder %s26, 7
      %p191 = scmp.ne.s32.totalorder %s186, %s188
      %p192 = scmp.eq.s32.totalorder %s26, 0
      %p193 = por %p191, %p192
      %p194 = scmp.ne.s32.totalorder %s186, %s188
      %p195 = scmp.eq.s32.totalorder %s31, 7
      %p196 = por %p194, %p195
      %p197 = scmp.ne.s32.totalorder %s188, %s189
      %p198 = scmp.eq.s32.totalorder %s31, 0
      %p199 = por %p197, %p198
      %p200 = scmp.ne.s32.totalorder %s188, %s189
      %p201 = scmp.eq.s32.totalorder %s32, 7
      %p202 = por %p200, %p201
      %p204 = scmp.ne.s32.totalorder %s189, %s203
      %p205 = scmp.eq.s32.totalorder %s32, 0
      %p206 = por %p204, %p205
      %s208 = sadd.s32 %s207, 1
      %p211 = scmp.eq.s32.totalorder %s26, 7
      %p212 = scmp.ne.s32.totalorder %s207, %s209
      %p213 = scmp.eq.s32.totalorder %s26, 0
      %p214 = por %p212, %p213
      %p215 = scmp.ne.s32.totalorder %s207, %s209
      %p216 = scmp.eq.s32.totalorder %s31, 7
      %p217 = por %p215, %p216
      %p218 = scmp.ne.s32.totalorder %s209, %s210
      %p219 = scmp.eq.s32.totalorder %s31, 0
      %p220 = por %p218, %p219
      %p221 = scmp.ne.s32.totalorder %s209, %s210
      %p222 = scmp.eq.s32.totalorder %s32, 7
      %p223 = por %p221, %p222
      %p225 = scmp.ne.s32.totalorder %s210, %s224
      %p226 = scmp.eq.s32.totalorder %s32, 0
      %p227 = por %p225, %p226
      %s229 = sadd.s32 %s228, 1
      %p232 = scmp.eq.s32.totalorder %s26, 7
      %p233 = scmp.ne.s32.totalorder %s228, %s230
      %p234 = scmp.eq.s32.totalorder %s26, 0
      %p235 = por %p233, %p234
      %p236 = scmp.ne.s32.totalorder %s228, %s230
      %p237 = scmp.eq.s32.totalorder %s31, 7
      %p238 = por %p236, %p237
      %p239 = scmp.ne.s32.totalorder %s230, %s231
      %p240 = scmp.eq.s32.totalorder %s31, 0
      %p241 = por %p239, %p240
      %p242 = scmp.ne.s32.totalorder %s230, %s231
      %p243 = scmp.eq.s32.totalorder %s32, 7
      %p244 = por %p242, %p243
      %p246 = scmp.ne.s32.totalorder %s231, %s245
      %p247 = scmp.eq.s32.totalorder %s32, 0
      %p248 = por %p246, %p247
      %s250 = sadd.s32 %s249, 1
      %p253 = scmp.eq.s32.totalorder %s26, 7
      %p254 = scmp.ne.s32.totalorder %s249, %s251
      %p255 = scmp.eq.s32.totalorder %s26, 0
      %p256 = por %p254, %p255
      %p257 = scmp.ne.s32.totalorder %s249, %s251
      %p258 = scmp.eq.s32.totalorder %s31, 7
      %p259 = por %p257, %p258
      %p260 = scmp.ne.s32.totalorder %s251, %s252
      %p261 = scmp.eq.s32.totalorder %s31, 0
      %p262 = por %p260, %p261
      %p263 = scmp.ne.s32.totalorder %s251, %s252
      %p264 = scmp.eq.s32.totalorder %s32, 7
      %p265 = por %p263, %p264
      %p267 = scmp.ne.s32.totalorder %s252, %s266
      %p268 = scmp.eq.s32.totalorder %s32, 0
      %p269 = por %p267, %p268
      %s271 = sadd.s32 %s270, 1
      %p274 = scmp.eq.s32.totalorder %s26, 7
      %p275 = scmp.ne.s32.totalorder %s270, %s272
      %p276 = scmp.eq.s32.totalorder %s26, 0
      %p277 = por %p275, %p276
      %p278 = scmp.ne.s32.totalorder %s270, %s272
      %p279 = scmp.eq.s32.totalorder %s31, 7
      %p280 = por %p278, %p279
      %p281 = scmp.ne.s32.totalorder %s272, %s273
      %p282 = scmp.eq.s32.totalorder %s31, 0
      %p283 = por %p281, %p282
      %p284 = scmp.ne.s32.totalorder %s272, %s273
      %p285 = scmp.eq.s32.totalorder %s32, 7
      %p286 = por %p284, %p285
      %p288 = scmp.ne.s32.totalorder %s273, %s287
      %p289 = scmp.eq.s32.totalorder %s32, 0
      %p290 = por %p288, %p289
      %s292 = sadd.s32 %s291, 1
      %p295 = scmp.eq.s32.totalorder %s26, 7
      %p296 = scmp.ne.s32.totalorder %s291, %s293
      %p297 = scmp.eq.s32.totalorder %s26, 0
      %p298 = por %p296, %p297
      %p299 = scmp.ne.s32.totalorder %s291, %s293
      %p300 = scmp.eq.s32.totalorder %s31, 7
      %p301 = por %p299, %p300
      %p302 = scmp.ne.s32.totalorder %s293, %s294
      %p303 = scmp.eq.s32.totalorder %s31, 0
      %p304 = por %p302, %p303
      %p305 = scmp.ne.s32.totalorder %s293, %s294
      %p306 = scmp.eq.s32.totalorder %s32, 7
      %p307 = por %p305, %p306
      %p309 = scmp.ne.s32.totalorder %s294, %s308
      %p310 = scmp.eq.s32.totalorder %s32, 0
      %p311 = por %p309, %p310
      %s312 = ssub.s32 %s26, %s33
      %p313 = scmp.eq.s32.totalorder %s312, 0
      %s315 = sadd.s32 %s314, 1
      %s316 = scalar_select %p313, %s314, %s315
      %p319 = pneg %p313
      %p320 = scmp.eq.s32.totalorder %s26, 7
      %p321 = por %p319, %p320
      %p322 = scmp.ne.s32.totalorder %s314, %s317
      %p323 = scmp.eq.s32.totalorder %s26, 0
      %p324 = por %p322, %p323
      %p325 = scmp.ne.s32.totalorder %s314, %s317
      %p326 = scmp.eq.s32.totalorder %s31, 7
      %p327 = por %p325, %p326
      %p328 = scmp.ne.s32.totalorder %s317, %s318
      %p329 = scmp.eq.s32.totalorder %s31, 0
      %p330 = por %p328, %p329
      %p331 = scmp.ne.s32.totalorder %s317, %s318
      %p332 = scmp.eq.s32.totalorder %s32, 7
      %p333 = por %p331, %p332
      %p335 = scmp.ne.s32.totalorder %s318, %s334
      %p336 = scmp.eq.s32.totalorder %s32, 0
      %p337 = por %p335, %p336
      %p338 = scmp.le.s32.totalorder 1, %s26
      %p339 = scmp.lt.s32.totalorder %s26, 9
      %p340 = pnand %p338, %p339
      %p341 = pneg %p340
      // Predicated region
      $region9: #{tpu_custom_call.1} parent=5 // pred_check
        _
      $region10: #{tpu_custom_call.1} parent=5 // pred_check_branch
        %343 = sbr.rel (%p340) target = $region12
      $region11: #{tpu_custom_call.1} parent=5 // pred_region
        %s344 = ssub.s32 %s26, 1
        // Predicated region
        $region13: #{tpu_custom_call.1} parent=11 // pred_check
          %p345 = pneg %p73
        $region14: #{tpu_custom_call.1} parent=11 // pred_check_branch
          %347 = sbr.rel (%p345) target = $region16
        $region15: #{tpu_custom_call.1} parent=11 // pred_region
          _
        $region16: #{tpu_custom_call.1} parent=11 // pred_fallthru
          _
        // Predicated region
        $region17: #{tpu_custom_call.1} parent=11 // pred_check
          %p348 = pneg %p94
        $region18: #{tpu_custom_call.1} parent=11 // pred_check_branch
          %350 = sbr.rel (%p348) target = $region20
        $region19: #{tpu_custom_call.1} parent=11 // pred_region
          %s352 = ssub.s32 256, 256
          %353 = vsyncadd [#allocation6], %s352
          %s354 = sshll.u32 [#allocation5], 4
          %s355 = int_to_ptr.vmem [resolvable:$true] %s354
          %360 = dma.hbm_to_vmem [thread:$0]  %s2, 256, %s355, [#allocation6], 128, 128, 8
        $region20: #{tpu_custom_call.1} parent=11 // pred_fallthru
          _
        // Predicated region
        $region21: #{tpu_custom_call.1} parent=11 // pred_check
          %p361 = pneg %p115
        $region22: #{tpu_custom_call.1} parent=11 // pred_check_branch
          %363 = sbr.rel (%p361) target = $region24
        $region23: #{tpu_custom_call.1} parent=11 // pred_region
          _
        $region24: #{tpu_custom_call.1} parent=11 // pred_fallthru
          _
        // Predicated region
        $region25: #{tpu_custom_call.1} parent=11 // pred_check
          %p364 = pneg %p136
        $region26: #{tpu_custom_call.1} parent=11 // pred_check_branch
          %366 = sbr.rel (%p364) target = $region28
        $region27: #{tpu_custom_call.1} parent=11 // pred_region
          _
        $region28: #{tpu_custom_call.1} parent=11 // pred_fallthru
          _
        // Predicated region
        $region29: #{tpu_custom_call.1} parent=11 // pred_check
          %p367 = pneg %p157
        $region30: #{tpu_custom_call.1} parent=11 // pred_check_branch
          %369 = sbr.rel (%p367) target = $region32
        $region31: #{tpu_custom_call.1} parent=11 // pred_region
          _
        $region32: #{tpu_custom_call.1} parent=11 // pred_fallthru
          _
        // Predicated region
        $region33: #{tpu_custom_call.1} parent=11 // pred_check
          %p370 = pneg %p178
        $region34: #{tpu_custom_call.1} parent=11 // pred_check_branch
          %372 = sbr.rel (%p370) target = $region36
        $region35: #{tpu_custom_call.1} parent=11 // pred_region
          %s374 = ssub.s32 128, 128
          %375 = vsyncadd [#allocation6], %s374
          %s376 = sshll.u32 [#allocation7], 4
          %s377 = int_to_ptr.vmem [resolvable:$true] %s376
          %382 = dma.hbm_to_vmem [thread:$0]  %s6, 128, %s377, [#allocation6], 64, 64, 4
        $region36: #{tpu_custom_call.1} parent=11 // pred_fallthru
          _
        // Predicated region
        $region37: #{tpu_custom_call.1} parent=11 // pred_check
          %p383 = pneg %p199
        $region38: #{tpu_custom_call.1} parent=11 // pred_check_branch
          %385 = sbr.rel (%p383) target = $region40
        $region39: #{tpu_custom_call.1} parent=11 // pred_region
          _
        $region40: #{tpu_custom_call.1} parent=11 // pred_fallthru
          _
        // Predicated region
        $region41: #{tpu_custom_call.1} parent=11 // pred_check
          %p386 = pneg %p220
        $region42: #{tpu_custom_call.1} parent=11 // pred_check_branch
          %388 = sbr.rel (%p386) target = $region44
        $region43: #{tpu_custom_call.1} parent=11 // pred_region
          _
        $region44: #{tpu_custom_call.1} parent=11 // pred_fallthru
          _
        // Predicated region
        $region45: #{tpu_custom_call.1} parent=11 // pred_check
          %p389 = pneg %p241
        $region46: #{tpu_custom_call.1} parent=11 // pred_check_branch
          %391 = sbr.rel (%p389) target = $region48
        $region47: #{tpu_custom_call.1} parent=11 // pred_region
          _
        $region48: #{tpu_custom_call.1} parent=11 // pred_fallthru
          _
        // Predicated region
        $region49: #{tpu_custom_call.1} parent=11 // pred_check
          %p392 = pneg %p262
        $region50: #{tpu_custom_call.1} parent=11 // pred_check_branch
          %394 = sbr.rel (%p392) target = $region52
        $region51: #{tpu_custom_call.1} parent=11 // pred_region
          _
        $region52: #{tpu_custom_call.1} parent=11 // pred_fallthru
          _
        // Predicated region
        $region53: #{tpu_custom_call.1} parent=11 // pred_check
          %p395 = pneg %p283
        $region54: #{tpu_custom_call.1} parent=11 // pred_check_branch
          %397 = sbr.rel (%p395) target = $region56
        $region55: #{tpu_custom_call.1} parent=11 // pred_region
          _
        $region56: #{tpu_custom_call.1} parent=11 // pred_fallthru
          _
        // Predicated region
        $region57: #{tpu_custom_call.1} parent=11 // pred_check
          %p398 = pneg %p304
        $region58: #{tpu_custom_call.1} parent=11 // pred_check_branch
          %400 = sbr.rel (%p398) target = $region60
        $region59: #{tpu_custom_call.1} parent=11 // pred_region
          _
        $region60: #{tpu_custom_call.1} parent=11 // pred_fallthru
          _
      $region12: #{tpu_custom_call.1} parent=5 // pred_fallthru
        _
      %p401 = scmp.lt.s32.totalorder %s26, 8
      // Predicated region
      $region61: #{tpu_custom_call.1} parent=5 // pred_check
        %p402 = pneg %p401
      $region62: #{tpu_custom_call.1} parent=5 // pred_check_branch
        %404 = sbr.rel (%p402) target = $region64
      $region63: #{tpu_custom_call.1} parent=5 // pred_region
        // Predicated region
        $region65: #{tpu_custom_call.1} parent=63 // pred_check
          %p405 = pneg %p46
        $region66: #{tpu_custom_call.1} parent=63 // pred_check_branch
          %407 = sbr.rel (%p405) target = $region68
        $region67: #{tpu_custom_call.1} parent=63 // pred_region
          %s408 = sand.u32 %s36, 1
          %s409 = scalar_lea.sflag [#allocation3], %s408
          %s410 = sand.u32 %s36, 1
          %s411 = smul.addr %s410, 8
          %s412 = scalar_lea.vmem [#allocation2], %s411
          %s414 = ssub.s32 128, 128
          %415 = vsyncadd %s409, %s414
          %s416 = smul.addr %s26, 2
          %s417 = smul.addr %s416, 64
          %s418 = scalar_lea.hbm %s0, %s417
          %s419 = sshll.u32 %s412, 4
          %s420 = int_to_ptr.vmem [resolvable:$true] %s419
          %425 = dma.hbm_to_vmem [thread:$0]  %s418, 128, %s420, %s409, 64, 64, 4
        $region68: #{tpu_custom_call.1} parent=63 // pred_fallthru
          _
      $region64: #{tpu_custom_call.1} parent=5 // pred_fallthru
        _
      %p426 = scmp.le.s32.totalorder 1, %s26
      %p427 = scmp.lt.s32.totalorder %s26, 9
      %p428 = pnand %p426, %p427
      %p429 = pneg %p428
      // Predicated region
      $region69: #{tpu_custom_call.1} parent=5 // pred_check
        _
      $region70: #{tpu_custom_call.1} parent=5 // pred_check_branch
        %431 = sbr.rel (%p428) target = $region72
      $region71: #{tpu_custom_call.1} parent=5 // pred_region
        %s432 = ssub.s32 %s26, 1
        %s433 = sand.u32 %s39, 1
        %s434 = scalar_lea.sflag [#allocation3], %s433
        %s435 = sand.u32 %s39, 1
        %s436 = smul.addr %s435, 8
        %s437 = scalar_lea.vmem [#allocation2], %s436
        // Predicated region
        $region73: #{tpu_custom_call.1} parent=71 // pred_check
          %p438 = pneg %p52
        $region74: #{tpu_custom_call.1} parent=71 // pred_check_branch
          %440 = sbr.rel (%p438) target = $region76
        $region75: #{tpu_custom_call.1} parent=71 // pred_region
          %441 = dma.done %s434, 128
        $region76: #{tpu_custom_call.1} parent=71 // pred_fallthru
          _
        // Predicated region
        $region77: #{tpu_custom_call.1} parent=71 // pred_check
          %p442 = pneg %p94
        $region78: #{tpu_custom_call.1} parent=71 // pred_check_branch
          %444 = sbr.rel (%p442) target = $region80
        $region79: #{tpu_custom_call.1} parent=71 // pred_region
          %445 = dma.done [#allocation6], 256
        $region80: #{tpu_custom_call.1} parent=71 // pred_fallthru
          _
        // Predicated region
        $region81: #{tpu_custom_call.1} parent=71 // pred_check
          %p446 = pneg %p178
        $region82: #{tpu_custom_call.1} parent=71 // pred_check_branch
          %448 = sbr.rel (%p446) target = $region84
        $region83: #{tpu_custom_call.1} parent=71 // pred_region
          %449 = dma.done [#allocation6], 128
        $region84: #{tpu_custom_call.1} parent=71 // pred_fallthru
          _
        %s450 = sand.u32 %s39, 1
        %s451 = scalar_lea.sflag [#allocation3], %s450
        %s452 = sand.u32 %s39, 1
        %s453 = smul.addr %s452, 8
        %s454 = scalar_lea.vmem [#allocation2], %s453
        %p455 = pneg %p52
        %p456 = pneg %p49
        %p457 = pneg %p73
        %p458 = pneg %p70
        %p459 = pneg %p94
        %p460 = pneg %p91
        %p461 = pneg %p115
        %p462 = pneg %p112
        %p463 = pneg %p136
        %p464 = pneg %p133
        %p465 = pneg %p157
        %p466 = pneg %p154
        %p467 = pneg %p178
        %p468 = pneg %p175
        %p469 = pneg %p199
        %p470 = pneg %p196
        %p471 = pneg %p220
        %p472 = pneg %p217
        %p473 = pneg %p241
        %p474 = pneg %p238
        %p475 = pneg %p262
        %p476 = pneg %p259
        %p477 = pneg %p283
        %p478 = pneg %p280
        %p479 = pneg %p304
        %p480 = pneg %p301
        %p481 = pneg %p330
        %p482 = pneg %p327
        %s483 = sand.u32 %s317, 1
        %s484 = scalar_lea.sflag [#allocation4], %s483
        %s485 = sand.u32 %s317, 1
        %s486 = smul.addr %s485, 8
        %s487 = scalar_lea.vmem [#allocation8], %s486
        %v489 = vld [vmem:[%s437] sm:$0xf]
        %v490 = vld [vmem:[%s437 + $0x4] sm:$0xf]
        %v491 = vld [vmem:[%s3] sm:$0xf]
        %v492 = vld [vmem:[%s3 + $0x4] sm:$0xf]
        %v495 = vunpack.c.l.b16 %v489
        %v496 = vunpack.c.l.b16 %v490
        %v497 = vpack.c.b16 %v496, %v495
        %v500 = vunpack.c.l.b16 %v491
        %v501 = vunpack.c.l.b16 %v492
        %v502 = vpack.c.b16 %v501, %v500
        %vm504 = vcmask 130048
        %v506 = vsel %vm504, %v497, 0
        %508 = vmatprep.subr.bf16.mxu0 0
        %509 = vmatpush1.bf16.msra.mxu0 %v502
        %510 = vmatprep.subr.bf16.mxu0 0
        %511 = vmatpush1.bf16.msra.mxu0 0
        %512 = vmatprep.subr.bf16.mxu0 0
        %513 = vmatpush1.bf16.msra.mxu0 0
        %514 = vmatprep.subr.bf16.mxu0 0
        %515 = vmatpush1.bf16.msra.mxu0 0
        %516 = vmatprep.subr.bf16.mxu0 0
        %517 = vmatpush1.bf16.msra.mxu0 0
        %518 = vmatprep.subr.bf16.mxu0 0
        %519 = vmatpush1.bf16.msra.mxu0 0
        %520 = vmatprep.subr.bf16.mxu0 0
        %521 = vmatpush1.bf16.msra.mxu0 0
        %522 = vmatprep.subr.bf16.mxu0 0
        %523 = vmatpush1.bf16.msra.mxu0 0
        %524 = vmatprep.subr.bf16.mxu0 0
        %525 = vmatpush1.bf16.msra.mxu0 0
        %526 = vmatprep.subr.bf16.mxu0 0
        %527 = vmatpush1.bf16.msra.mxu0 0
        %528 = vmatprep.subr.bf16.mxu0 0
        %529 = vmatpush1.bf16.msra.mxu0 0
        %530 = vmatprep.subr.bf16.mxu0 0
        %531 = vmatpush1.bf16.msra.mxu0 0
        %532 = vmatprep.subr.bf16.mxu0 0
        %533 = vmatpush1.bf16.msra.mxu0 0
        %534 = vmatprep.subr.bf16.mxu0 0
        %535 = vmatpush1.bf16.msra.mxu0 0
        %536 = vmatprep.subr.bf16.mxu0 0
        %537 = vmatpush1.bf16.msra.mxu0 0
        %538 = vmatprep.subr.bf16.mxu0 0
        %539 = vmatpush1.bf16.msra.mxu0 0
        %540 = vmatprep.mubr.bf16.mxu0 0
        %541 = vmatmul.mubr.bf16.gmra.mrb[0].mxu0 %v506
        %v542 = vpop.f32.mrb[0].mxu0
        %v543 = vadd.f32 0.0, %v542
        %v544 = vpop.f32.mrb[0].mxu0
        %v545 = vpop.f32.mrb[0].mxu0
        %v546 = vadd.f32 0.0, %v545
        %v547 = vpop.f32.mrb[0].mxu0
        %548 = vdwg.mxu0
        %v549 = vld [vmem:[%s4] sm:$0xf]
        %v550 = vld [vmem:[%s4 + $0x4] sm:$0xf]
        %v553 = vunpack.c.l.b16 %v549
        %v554 = vunpack.c.l.b16 %v550
        %v555 = vpack.c.b16 %v554, %v553
        %557 = vmatprep.subr.bf16.mxu0 0
        %558 = vmatpush1.bf16.msra.mxu0 %v555
        %559 = vmatprep.subr.bf16.mxu0 0
        %560 = vmatpush1.bf16.msra.mxu0 0
        %561 = vmatprep.subr.bf16.mxu0 0
        %562 = vmatpush1.bf16.msra.mxu0 0
        %563 = vmatprep.subr.bf16.mxu0 0
        %564 = vmatpush1.bf16.msra.mxu0 0
        %565 = vmatprep.subr.bf16.mxu0 0
        %566 = vmatpush1.bf16.msra.mxu0 0
        %567 = vmatprep.subr.bf16.mxu0 0
        %568 = vmatpush1.bf16.msra.mxu0 0
        %569 = vmatprep.subr.bf16.mxu0 0
        %570 = vmatpush1.bf16.msra.mxu0 0
        %571 = vmatprep.subr.bf16.mxu0 0
        %572 = vmatpush1.bf16.msra.mxu0 0
        %573 = vmatprep.subr.bf16.mxu0 0
        %574 = vmatpush1.bf16.msra.mxu0 0
        %575 = vmatprep.subr.bf16.mxu0 0
        %576 = vmatpush1.bf16.msra.mxu0 0
        %577 = vmatprep.subr.bf16.mxu0 0
        %578 = vmatpush1.bf16.msra.mxu0 0
        %579 = vmatprep.subr.bf16.mxu0 0
        %580 = vmatpush1.bf16.msra.mxu0 0
        %581 = vmatprep.subr.bf16.mxu0 0
        %582 = vmatpush1.bf16.msra.mxu0 0
        %583 = vmatprep.subr.bf16.mxu0 0
        %584 = vmatpush1.bf16.msra.mxu0 0
        %585 = vmatprep.subr.bf16.mxu0 0
        %586 = vmatpush1.bf16.msra.mxu0 0
        %587 = vmatprep.subr.bf16.mxu0 0
        %588 = vmatpush1.bf16.msra.mxu0 0
        %589 = vmatprep.mubr.bf16.mxu0 0
        %590 = vmatmul.mubr.bf16.gmra.mrb[0].mxu0 %v506
        %v591 = vpop.f32.mrb[0].mxu0
        %v592 = vadd.f32 0.0, %v591
        %v593 = vpop.f32.mrb[0].mxu0
        %v594 = vpop.f32.mrb[0].mxu0
        %v595 = vadd.f32 0.0, %v594
        %v596 = vpop.f32.mrb[0].mxu0
        %597 = vdwg.mxu0
        %v598 = vadd.f32 %v543, %v592
        %v599 = vadd.f32 %v546, %v595
        %v600 = vpack.c.bf16 %v599, %v598
        %v601 = vpack.c.bf16 %v546, %v543
        %v602 = vpack.c.bf16 %v595, %v592
        %v603 = vld [vmem:[%s5] sm:$0xf]
        %v604 = vld [vmem:[%s5 + $0x4] sm:$0xf]
        %v607 = vunpack.c.l.b16 %v603
        %v608 = vunpack.c.l.b16 %v604
        %v609 = vpack.c.b16 %v608, %v607
        %v611 = vsel %vm504, %v609, 0
        %613 = vmatprep.subr.bf16.mxu0 0
        %614 = vmatpush1.bf16.msra.mxu0 %v601
        %615 = vmatprep.subr.bf16.mxu0 0
        %616 = vmatpush1.bf16.msra.mxu0 0
        %617 = vmatprep.subr.bf16.mxu0 0
        %618 = vmatpush1.bf16.msra.mxu0 0
        %619 = vmatprep.subr.bf16.mxu0 0
        %620 = vmatpush1.bf16.msra.mxu0 0
        %621 = vmatprep.subr.bf16.mxu0 0
        %622 = vmatpush1.bf16.msra.mxu0 0
        %623 = vmatprep.subr.bf16.mxu0 0
        %624 = vmatpush1.bf16.msra.mxu0 0
        %625 = vmatprep.subr.bf16.mxu0 0
        %626 = vmatpush1.bf16.msra.mxu0 0
        %627 = vmatprep.subr.bf16.mxu0 0
        %628 = vmatpush1.bf16.msra.mxu0 0
        %629 = vmatprep.subr.bf16.mxu0 0
        %630 = vmatpush1.bf16.msra.mxu0 0
        %631 = vmatprep.subr.bf16.mxu0 0
        %632 = vmatpush1.bf16.msra.mxu0 0
        %633 = vmatprep.subr.bf16.mxu0 0
        %634 = vmatpush1.bf16.msra.mxu0 0
        %635 = vmatprep.subr.bf16.mxu0 0
        %636 = vmatpush1.bf16.msra.mxu0 0
        %637 = vmatprep.subr.bf16.mxu0 0
        %638 = vmatpush1.bf16.msra.mxu0 0
        %639 = vmatprep.subr.bf16.mxu0 0
        %640 = vmatpush1.bf16.msra.mxu0 0
        %641 = vmatprep.subr.bf16.mxu0 0
        %642 = vmatpush1.bf16.msra.mxu0 0
        %643 = vmatprep.subr.bf16.mxu0 0
        %644 = vmatpush1.bf16.msra.mxu0 0
        %645 = vmatprep.mubr.bf16.mxu0 0
        %646 = vmatmul.mubr.bf16.gmra.mrb[0].mxu0 %v611
        %v647 = vpop.f32.mrb[0].mxu0
        %v648 = vadd.f32 0.0, %v647
        %v649 = vpop.f32.mrb[0].mxu0
        %v650 = vpop.f32.mrb[0].mxu0
        %v651 = vadd.f32 0.0, %v650
        %v652 = vpop.f32.mrb[0].mxu0
        %653 = vdwg.mxu0
        %v654 = vld [vmem:[#allocation7] sm:$0xf]
        %v655 = vld [vmem:[#allocation7 + $0x4] sm:$0xf]
        %v658 = vunpack.c.l.b16 %v654
        %v659 = vunpack.c.l.b16 %v655
        %v660 = vpack.c.b16 %v659, %v658
        %v662 = vsel %vm504, %v660, 0
        %664 = vmatprep.subr.bf16.mxu0 0
        %665 = vmatpush1.bf16.msra.mxu0 %v602
        %666 = vmatprep.subr.bf16.mxu0 0
        %667 = vmatpush1.bf16.msra.mxu0 0
        %668 = vmatprep.subr.bf16.mxu0 0
        %669 = vmatpush1.bf16.msra.mxu0 0
        %670 = vmatprep.subr.bf16.mxu0 0
        %671 = vmatpush1.bf16.msra.mxu0 0
        %672 = vmatprep.subr.bf16.mxu0 0
        %673 = vmatpush1.bf16.msra.mxu0 0
        %674 = vmatprep.subr.bf16.mxu0 0
        %675 = vmatpush1.bf16.msra.mxu0 0
        %676 = vmatprep.subr.bf16.mxu0 0
        %677 = vmatpush1.bf16.msra.mxu0 0
        %678 = vmatprep.subr.bf16.mxu0 0
        %679 = vmatpush1.bf16.msra.mxu0 0
        %680 = vmatprep.subr.bf16.mxu0 0
        %681 = vmatpush1.bf16.msra.mxu0 0
        %682 = vmatprep.subr.bf16.mxu0 0
        %683 = vmatpush1.bf16.msra.mxu0 0
        %684 = vmatprep.subr.bf16.mxu0 0
        %685 = vmatpush1.bf16.msra.mxu0 0
        %686 = vmatprep.subr.bf16.mxu0 0
        %687 = vmatpush1.bf16.msra.mxu0 0
        %688 = vmatprep.subr.bf16.mxu0 0
        %689 = vmatpush1.bf16.msra.mxu0 0
        %690 = vmatprep.subr.bf16.mxu0 0
        %691 = vmatpush1.bf16.msra.mxu0 0
        %692 = vmatprep.subr.bf16.mxu0 0
        %693 = vmatpush1.bf16.msra.mxu0 0
        %694 = vmatprep.subr.bf16.mxu0 0
        %695 = vmatpush1.bf16.msra.mxu0 0
        %696 = vmatprep.mubr.bf16.mxu0 0
        %697 = vmatmul.mubr.bf16.gmra.mrb[0].mxu0 %v662
        %v698 = vpop.f32.mrb[0].mxu0
        %v699 = vadd.f32 0.0, %v698
        %v700 = vpop.f32.mrb[0].mxu0
        %v701 = vpop.f32.mrb[0].mxu0
        %v702 = vadd.f32 0.0, %v701
        %v703 = vpop.f32.mrb[0].mxu0
        %704 = vdwg.mxu0
        %v705 = vld [vmem:[%s7] sm:$0xf]
        %v706 = vld [vmem:[%s7 + $0x4] sm:$0xf]
        %v709 = vunpack.c.l.b16 %v705
        %v710 = vunpack.c.l.b16 %v706
        %v711 = vpack.c.b16 %v710, %v709
        %v713 = vsel %vm504, %v711, 0
        %715 = vmatprep.subr.bf16.mxu0 0
        %716 = vmatpush1.bf16.msra.mxu0 %v600
        %717 = vmatprep.subr.bf16.mxu0 0
        %718 = vmatpush1.bf16.msra.mxu0 0
        %719 = vmatprep.subr.bf16.mxu0 0
        %720 = vmatpush1.bf16.msra.mxu0 0
        %721 = vmatprep.subr.bf16.mxu0 0
        %722 = vmatpush1.bf16.msra.mxu0 0
        %723 = vmatprep.subr.bf16.mxu0 0
        %724 = vmatpush1.bf16.msra.mxu0 0
        %725 = vmatprep.subr.bf16.mxu0 0
        %726 = vmatpush1.bf16.msra.mxu0 0
        %727 = vmatprep.subr.bf16.mxu0 0
        %728 = vmatpush1.bf16.msra.mxu0 0
        %729 = vmatprep.subr.bf16.mxu0 0
        %730 = vmatpush1.bf16.msra.mxu0 0
        %731 = vmatprep.subr.bf16.mxu0 0
        %732 = vmatpush1.bf16.msra.mxu0 0
        %733 = vmatprep.subr.bf16.mxu0 0
        %734 = vmatpush1.bf16.msra.mxu0 0
        %735 = vmatprep.subr.bf16.mxu0 0
        %736 = vmatpush1.bf16.msra.mxu0 0
        %737 = vmatprep.subr.bf16.mxu0 0
        %738 = vmatpush1.bf16.msra.mxu0 0
        %739 = vmatprep.subr.bf16.mxu0 0
        %740 = vmatpush1.bf16.msra.mxu0 0
        %741 = vmatprep.subr.bf16.mxu0 0
        %742 = vmatpush1.bf16.msra.mxu0 0
        %743 = vmatprep.subr.bf16.mxu0 0
        %744 = vmatpush1.bf16.msra.mxu0 0
        %745 = vmatprep.subr.bf16.mxu0 0
        %746 = vmatpush1.bf16.msra.mxu0 0
        %747 = vmatprep.mubr.bf16.mxu0 0
        %748 = vmatmul.mubr.bf16.gmra.mrb[0].mxu0 %v713
        %v749 = vpop.f32.mrb[0].mxu0
        %v750 = vadd.f32 0.0, %v749
        %v751 = vpop.f32.mrb[0].mxu0
        %v752 = vpop.f32.mrb[0].mxu0
        %v753 = vadd.f32 0.0, %v752
        %v754 = vpop.f32.mrb[0].mxu0
        %755 = vdwg.mxu0
        %v756 = vsub.f32 %v648, %v699
        %v757 = vsub.f32 %v651, %v702
        %v758 = vsub.f32 %v750, %v648
        %v759 = vsub.f32 %v753, %v651
        %v760 = vsub.f32 %v758, %v699
        %v761 = vsub.f32 %v759, %v702
        %v762 = vld [vmem:[%s1] sm:$0xff]
        %v763 = vld [vmem:[%s1 + $0x8] sm:$0xff]
        %v764 = vld [vmem:[#allocation5] sm:$0xff]
        %v765 = vld [vmem:[#allocation5 + $0x8] sm:$0xff]
        %v766 = vmul.f32 %v762, %v756
        %v767 = vmul.f32 %v763, %v757
        %v768 = vmul.f32 %v764, %v760
        %v769 = vmul.f32 %v765, %v761
        %v770 = vsub.f32 %v766, %v768
        %v771 = vsub.f32 %v767, %v769
        %v772 = vmul.f32 %v762, %v760
        %v773 = vmul.f32 %v763, %v761
        %v774 = vmul.f32 %v764, %v756
        %v775 = vmul.f32 %v765, %v757
        %v776 = vadd.f32 %v772, %v774
        %v777 = vadd.f32 %v773, %v775
        %v778 = vadd.f32 %v770, %v776
        %v779 = vadd.f32 %v771, %v777
        %v780 = vpack.c.bf16 %v779, %v778
        %v781 = vpack.c.bf16 %v771, %v770
        %v782 = vpack.c.bf16 %v777, %v776
        %v783 = vld [vmem:[%s8] sm:$0xf]
        %v785 = vsel %vm504, %v783, 0
        %787 = vmatprep.subr.bf16.mxu0 0
        %788 = vmatpush1.bf16.msra.mxu0 %v781
        %789 = vmatprep.subr.bf16.mxu0 0
        %790 = vmatpush1.bf16.msra.mxu0 0
        %791 = vmatprep.subr.bf16.mxu0 0
        %792 = vmatpush1.bf16.msra.mxu0 0
        %793 = vmatprep.subr.bf16.mxu0 0
        %794 = vmatpush1.bf16.msra.mxu0 0
        %795 = vmatprep.subr.bf16.mxu0 0
        %796 = vmatpush1.bf16.msra.mxu0 0
        %797 = vmatprep.subr.bf16.mxu0 0
        %798 = vmatpush1.bf16.msra.mxu0 0
        %799 = vmatprep.subr.bf16.mxu0 0
        %800 = vmatpush1.bf16.msra.mxu0 0
        %801 = vmatprep.subr.bf16.mxu0 0
        %802 = vmatpush1.bf16.msra.mxu0 0
        %803 = vmatprep.subr.bf16.mxu0 0
        %804 = vmatpush1.bf16.msra.mxu0 0
        %805 = vmatprep.subr.bf16.mxu0 0
        %806 = vmatpush1.bf16.msra.mxu0 0
        %807 = vmatprep.subr.bf16.mxu0 0
        %808 = vmatpush1.bf16.msra.mxu0 0
        %809 = vmatprep.subr.bf16.mxu0 0
        %810 = vmatpush1.bf16.msra.mxu0 0
        %811 = vmatprep.subr.bf16.mxu0 0
        %812 = vmatpush1.bf16.msra.mxu0 0
        %813 = vmatprep.subr.bf16.mxu0 0
        %814 = vmatpush1.bf16.msra.mxu0 0
        %815 = vmatprep.subr.bf16.mxu0 0
        %816 = vmatpush1.bf16.msra.mxu0 0
        %817 = vmatprep.subr.bf16.mxu0 0
        %818 = vmatpush1.bf16.msra.mxu0 0
        %819 = vmatprep.mubr.bf16.mxu0 0
        %820 = vmatmul.mubr.bf16.gmra.mrb[0].mxu0 %v785
        %v821 = vpop.f32.mrb[0].mxu0
        %v822 = vadd.f32 0.0, %v821
        %v823 = vpop.f32.mrb[0].mxu0
        %v824 = vpop.f32.mrb[0].mxu0
        %v825 = vpop.f32.mrb[0].mxu0
        %826 = vdwg.mxu0
        %v827 = vld [vmem:[%s9] sm:$0xf]
        %v829 = vsel %vm504, %v827, 0
        %831 = vmatprep.subr.bf16.mxu0 0
        %832 = vmatpush1.bf16.msra.mxu0 %v782
        %833 = vmatprep.subr.bf16.mxu0 0
        %834 = vmatpush1.bf16.msra.mxu0 0
        %835 = vmatprep.subr.bf16.mxu0 0
        %836 = vmatpush1.bf16.msra.mxu0 0
        %837 = vmatprep.subr.bf16.mxu0 0
        %838 = vmatpush1.bf16.msra.mxu0 0
        %839 = vmatprep.subr.bf16.mxu0 0
        %840 = vmatpush1.bf16.msra.mxu0 0
        %841 = vmatprep.subr.bf16.mxu0 0
        %842 = vmatpush1.bf16.msra.mxu0 0
        %843 = vmatprep.subr.bf16.mxu0 0
        %844 = vmatpush1.bf16.msra.mxu0 0
        %845 = vmatprep.subr.bf16.mxu0 0
        %846 = vmatpush1.bf16.msra.mxu0 0
        %847 = vmatprep.subr.bf16.mxu0 0
        %848 = vmatpush1.bf16.msra.mxu0 0
        %849 = vmatprep.subr.bf16.mxu0 0
        %850 = vmatpush1.bf16.msra.mxu0 0
        %851 = vmatprep.subr.bf16.mxu0 0
        %852 = vmatpush1.bf16.msra.mxu0 0
        %853 = vmatprep.subr.bf16.mxu0 0
        %854 = vmatpush1.bf16.msra.mxu0 0
        %855 = vmatprep.subr.bf16.mxu0 0
        %856 = vmatpush1.bf16.msra.mxu0 0
        %857 = vmatprep.subr.bf16.mxu0 0
        %858 = vmatpush1.bf16.msra.mxu0 0
        %859 = vmatprep.subr.bf16.mxu0 0
        %860 = vmatpush1.bf16.msra.mxu0 0
        %861 = vmatprep.subr.bf16.mxu0 0
        %862 = vmatpush1.bf16.msra.mxu0 0
        %863 = vmatprep.mubr.bf16.mxu0 0
        %864 = vmatmul.mubr.bf16.gmra.mrb[0].mxu0 %v829
        %v865 = vpop.f32.mrb[0].mxu0
        %v866 = vadd.f32 0.0, %v865
        %v867 = vpop.f32.mrb[0].mxu0
        %v868 = vpop.f32.mrb[0].mxu0
        %v869 = vpop.f32.mrb[0].mxu0
        %870 = vdwg.mxu0
        %v871 = vld [vmem:[%s10] sm:$0xf]
        %v873 = vsel %vm504, %v871, 0
        %875 = vmatprep.subr.bf16.mxu0 0
        %876 = vmatpush1.bf16.msra.mxu0 %v780
        %877 = vmatprep.subr.bf16.mxu0 0
        %878 = vmatpush1.bf16.msra.mxu0 0
        %879 = vmatprep.subr.bf16.mxu0 0
        %880 = vmatpush1.bf16.msra.mxu0 0
        %881 = vmatprep.subr.bf16.mxu0 0
        %882 = vmatpush1.bf16.msra.mxu0 0
        %883 = vmatprep.subr.bf16.mxu0 0
        %884 = vmatpush1.bf16.msra.mxu0 0
        %885 = vmatprep.subr.bf16.mxu0 0
        %886 = vmatpush1.bf16.msra.mxu0 0
        %887 = vmatprep.subr.bf16.mxu0 0
        %888 = vmatpush1.bf16.msra.mxu0 0
        %889 = vmatprep.subr.bf16.mxu0 0
        %890 = vmatpush1.bf16.msra.mxu0 0
        %891 = vmatprep.subr.bf16.mxu0 0
        %892 = vmatpush1.bf16.msra.mxu0 0
        %893 = vmatprep.subr.bf16.mxu0 0
        %894 = vmatpush1.bf16.msra.mxu0 0
        %895 = vmatprep.subr.bf16.mxu0 0
        %896 = vmatpush1.bf16.msra.mxu0 0
        %897 = vmatprep.subr.bf16.mxu0 0
        %898 = vmatpush1.bf16.msra.mxu0 0
        %899 = vmatprep.subr.bf16.mxu0 0
        %900 = vmatpush1.bf16.msra.mxu0 0
        %901 = vmatprep.subr.bf16.mxu0 0
        %902 = vmatpush1.bf16.msra.mxu0 0
        %903 = vmatprep.subr.bf16.mxu0 0
        %904 = vmatpush1.bf16.msra.mxu0 0
        %905 = vmatprep.subr.bf16.mxu0 0
        %906 = vmatpush1.bf16.msra.mxu0 0
        %907 = vmatprep.mubr.bf16.mxu0 0
        %908 = vmatmul.mubr.bf16.gmra.mrb[0].mxu0 %v873
        %v909 = vpop.f32.mrb[0].mxu0
        %v910 = vadd.f32 0.0, %v909
        %v911 = vpop.f32.mrb[0].mxu0
        %v912 = vpop.f32.mrb[0].mxu0
        %v913 = vpop.f32.mrb[0].mxu0
        %914 = vdwg.mxu0
        %v915 = vsub.f32 %v822, %v866
        %v916 = vpack.c.bf16 %v915, %v915
        %v917 = vsub.f32 %v910, %v822
        %v918 = vsub.f32 %v917, %v866
        %v919 = vpack.c.bf16 %v918, %v918
        %v920 = vld [vmem:[%s11] sm:$0xf]
        %v921 = vld [vmem:[%s11 + $0x4] sm:$0xf]
        %v922 = vld [vmem:[%s12] sm:$0xf]
        %v923 = vld [vmem:[%s12 + $0x4] sm:$0xf]
        %v926 = vunpack.c.l.b16 %v922
        %v927 = vunpack.c.l.b16 %v923
        %v928 = vpack.c.b16 %v927, %v926
        %v931 = vsel %vm504, %v919, 0
        %933 = vmatprep.subr.bf16.mxu0 0
        %934 = vmatpush1.bf16.msra.mxu0 %v928
        %935 = vmatprep.subr.bf16.mxu0 0
        %936 = vmatpush1.bf16.msra.mxu0 0
        %937 = vmatprep.subr.bf16.mxu0 0
        %938 = vmatpush1.bf16.msra.mxu0 0
        %939 = vmatprep.subr.bf16.mxu0 0
        %940 = vmatpush1.bf16.msra.mxu0 0
        %941 = vmatprep.subr.bf16.mxu0 0
        %942 = vmatpush1.bf16.msra.mxu0 0
        %943 = vmatprep.subr.bf16.mxu0 0
        %944 = vmatpush1.bf16.msra.mxu0 0
        %945 = vmatprep.subr.bf16.mxu0 0
        %946 = vmatpush1.bf16.msra.mxu0 0
        %947 = vmatprep.subr.bf16.mxu0 0
        %948 = vmatpush1.bf16.msra.mxu0 0
        %949 = vmatprep.subr.bf16.mxu0 0
        %950 = vmatpush1.bf16.msra.mxu0 0
        %951 = vmatprep.subr.bf16.mxu0 0
        %952 = vmatpush1.bf16.msra.mxu0 0
        %953 = vmatprep.subr.bf16.mxu0 0
        %954 = vmatpush1.bf16.msra.mxu0 0
        %955 = vmatprep.subr.bf16.mxu0 0
        %956 = vmatpush1.bf16.msra.mxu0 0
        %957 = vmatprep.subr.bf16.mxu0 0
        %958 = vmatpush1.bf16.msra.mxu0 0
        %959 = vmatprep.subr.bf16.mxu0 0
        %960 = vmatpush1.bf16.msra.mxu0 0
        %961 = vmatprep.subr.bf16.mxu0 0
        %962 = vmatpush1.bf16.msra.mxu0 0
        %963 = vmatprep.subr.bf16.mxu0 0
        %964 = vmatpush1.bf16.msra.mxu0 0
        %965 = vmatprep.mubr.bf16.mxu0 0
        %966 = vmatmul.mubr.bf16.gmra.mrb[0].mxu0 %v931
        %v967 = vpop.f32.mrb[0].mxu0
        %v968 = vadd.f32 0.0, %v967
        %v969 = vpop.f32.mrb[0].mxu0
        %v970 = vpop.f32.mrb[0].mxu0
        %v971 = vpop.f32.mrb[0].mxu0
        %972 = vdwg.mxu0
        %v975 = vunpack.c.l.b16 %v920
        %v976 = vunpack.c.l.b16 %v921
        %v977 = vpack.c.b16 %v976, %v975
        %v980 = vsel %vm504, %v916, 0
        %982 = vmatprep.subr.bf16.mxu0 0
        %983 = vmatpush1.bf16.msra.mxu0 %v977
        %984 = vmatprep.subr.bf16.mxu0 0
        %985 = vmatpush1.bf16.msra.mxu0 0
        %986 = vmatprep.subr.bf16.mxu0 0
        %987 = vmatpush1.bf16.msra.mxu0 0
        %988 = vmatprep.subr.bf16.mxu0 0
        %989 = vmatpush1.bf16.msra.mxu0 0
        %990 = vmatprep.subr.bf16.mxu0 0
        %991 = vmatpush1.bf16.msra.mxu0 0
        %992 = vmatprep.subr.bf16.mxu0 0
        %993 = vmatpush1.bf16.msra.mxu0 0
        %994 = vmatprep.subr.bf16.mxu0 0
        %995 = vmatpush1.bf16.msra.mxu0 0
        %996 = vmatprep.subr.bf16.mxu0 0
        %997 = vmatpush1.bf16.msra.mxu0 0
        %998 = vmatprep.subr.bf16.mxu0 0
        %999 = vmatpush1.bf16.msra.mxu0 0
        %1000 = vmatprep.subr.bf16.mxu0 0
        %1001 = vmatpush1.bf16.msra.mxu0 0
        %1002 = vmatprep.subr.bf16.mxu0 0
        %1003 = vmatpush1.bf16.msra.mxu0 0
        %1004 = vmatprep.subr.bf16.mxu0 0
        %1005 = vmatpush1.bf16.msra.mxu0 0
        %1006 = vmatprep.subr.bf16.mxu0 0
        %1007 = vmatpush1.bf16.msra.mxu0 0
        %1008 = vmatprep.subr.bf16.mxu0 0
        %1009 = vmatpush1.bf16.msra.mxu0 0
        %1010 = vmatprep.subr.bf16.mxu0 0
        %1011 = vmatpush1.bf16.msra.mxu0 0
        %1012 = vmatprep.subr.bf16.mxu0 0
        %1013 = vmatpush1.bf16.msra.mxu0 0
        %1014 = vmatprep.mubr.bf16.mxu0 0
        %1015 = vmatmul.mubr.bf16.gmra.mrb[0].mxu0 %v980
        %v1016 = vpop.f32.mrb[0].mxu0
        %v1017 = vadd.f32 %v968, %v1016
        %v1018 = vpop.f32.mrb[0].mxu0
        %v1019 = vpop.f32.mrb[0].mxu0
        %v1020 = vpop.f32.mrb[0].mxu0
        %1021 = vdwg.mxu0
        %vm1022 = vcmask 64512
        %1023 = vst.msk [vmem:[%s487] sm:$0xff] %vm1022, %v1017
        %s1024 = sand.u32 %s317, 1
        %s1025 = scalar_lea.sflag [#allocation4], %s1024
        %s1026 = sand.u32 %s317, 1
        %s1027 = smul.addr %s1026, 8
        %s1028 = scalar_lea.vmem [#allocation8], %s1027
        // Predicated region
        $region85: #{tpu_custom_call.1} parent=71 // pred_check
          %p1029 = pneg %p327
        $region86: #{tpu_custom_call.1} parent=71 // pred_check_branch
          %1031 = sbr.rel (%p1029) target = $region88
        $region87: #{tpu_custom_call.1} parent=71 // pred_region
          %s1033 = ssub.s32 128, 128
          %1034 = vsyncadd %s1025, %s1033
          %s1035 = smul.addr %s31, 128
          %s1036 = scalar_lea.hbm %s13, %s1035
          %s1038 = sshll.u32 %s1028, 4
          %s1039 = int_to_ptr.vmem [resolvable:$true] %s1038
          %1041 = dma.vmem_to_hbm [thread:$0]  %s1039, 128, %s1036, %s1025
        $region88: #{tpu_custom_call.1} parent=71 // pred_fallthru
          _
      $region72: #{tpu_custom_call.1} parent=5 // pred_fallthru
        _
      %p1042 = scmp.le.s32.totalorder 2, %s26
      // Predicated region
      $region89: #{tpu_custom_call.1} parent=5 // pred_check
        %p1043 = pneg %p1042
      $region90: #{tpu_custom_call.1} parent=5 // pred_check_branch
        %1045 = sbr.rel (%p1043) target = $region92
      $region91: #{tpu_custom_call.1} parent=5 // pred_region
        %s1046 = ssub.s32 %s26, 2
        // Predicated region
        $region93: #{tpu_custom_call.1} parent=91 // pred_check
          %p1047 = pneg %p333
        $region94: #{tpu_custom_call.1} parent=91 // pred_check_branch
          %1049 = sbr.rel (%p1047) target = $region96
        $region95: #{tpu_custom_call.1} parent=91 // pred_region
          %s1050 = sand.u32 %s318, 1
          %s1051 = scalar_lea.sflag [#allocation4], %s1050
          %s1052 = sand.u32 %s318, 1
          %s1053 = smul.addr %s1052, 8
          %s1054 = scalar_lea.vmem [#allocation8], %s1053
          %1055 = dma.done %s1051, 128
        $region96: #{tpu_custom_call.1} parent=91 // pred_fallthru
          _
      $region92: #{tpu_custom_call.1} parent=5 // pred_fallthru
        _
    $region6: #{tpu_custom_call.1} parent=1 // loop_footer
      %s30 = sadd.s32 1, %s26
    $region7: #{tpu_custom_call.1} parent=1 // loop_footer_branch
      %25 = sbr.rel target = $region3
    $region8: #{tpu_custom_call.1} parent=1 // loop_exit
      _
    %1056 = vsyncpa [#allocation3], 1
    %s1057 = scalar_lea.sflag [#allocation3], 1
    %1058 = vsyncpa %s1057, 1
    %1059 = vsyncpa [#allocation6], 1
    %1060 = vsyncpa [#allocation4], 1
    %s1061 = scalar_lea.sflag [#allocation4], 1
    %1062 = vsyncpa %s1061, 1

</llo_original>
